<compile_context>
chip_gen: v6e
topology: v6e:2x2x1
jax: 0.10.0
libtpu: 0.0.40
codegen_flags: <defaults>
</compile_context>

<pallas_src>
import jax
import jax.numpy as jnp
from jax.experimental import pallas as pl
from jax.experimental.pallas import tpu as pltpu

EPS = 1e-5  # nn.BatchNorm2d default


def _make_conv_kernel(hp, wp, cin, cout, compute_dtype):
    """Kernel A: maxpool + (conv3x3+ReLU) x2 per sample; partial BN stats across grid."""
    wb = wp + 2           # padded row width (columns 0 and wb-1 are zero / garbage)
    mi = hp * wb          # flattened spatial rows per sample (incl. garbage columns)
    interior = wb + 1     # first interior row of the flattened padded scratch

    def kernel(x_ref, w1_ref, w2_ref, wmask_ref,
               y_ref, sum_ref, sumsq_ref,
               pad1_ref, patch1_ref, pad2_ref, patch2_ref):
        n_id = pl.program_id(0)

        # ---- MaxPool2d(2): max over the four pre-arranged quadrants (pure VPU) ----
        pooled = jnp.maximum(jnp.maximum(x_ref[0, 0, 0], x_ref[0, 0, 1]),
                             jnp.maximum(x_ref[0, 1, 0], x_ref[0, 1, 1]))
        pooled = pooled.astype(jnp.float32)                       # (mi, cin)

        # ---- zero the top/bottom halo rows of the padded scratches once ----
        @pl.when(n_id == 0)
        def _init_halo():
            pad1_ref[pl.ds(0, interior), :] = jnp.zeros((interior, cin), jnp.float32)
            pad1_ref[pl.ds(interior + mi, interior), :] = jnp.zeros((interior, cin), jnp.float32)
            pad2_ref[pl.ds(0, interior), :] = jnp.zeros((interior, cout), jnp.float32)
            pad2_ref[pl.ds(interior + mi, interior), :] = jnp.zeros((interior, cout), jnp.float32)

        def conv3x3_relu(pad_ref, patch_ref, w_ref):
            # im2col: 9 contiguous sublane-offset windows -> (mi, 9*C) patch matrix,
            # then a single MXU matmul with K = 9*C and f32 accumulation.
            c = pad_ref.shape[-1]
            for ky in range(3):
                for kx in range(3):
                    t = ky * 3 + kx
                    patch_ref[:, t * c:(t + 1) * c] = (
                        pad_ref[pl.ds(ky * wb + kx, mi), :].astype(patch_ref.dtype))
            acc = jnp.dot(patch_ref[...], w_ref[...],
                          preferred_element_type=jnp.float32)
            return jnp.maximum(acc, 0.0)

        wmask = wmask_ref[...]                                    # (mi, 1): 0 on garbage cols

        # conv1 (zero W-padding columns are already baked into the input layout)
        pad1_ref[pl.ds(interior, mi), :] = pooled
        y1 = conv3x3_relu(pad1_ref, patch1_ref, w1_ref) * wmask   # (mi, cout)

        # conv2 (masked y1 provides the zero W-padding columns for free)
        pad2_ref[pl.ds(interior, mi), :] = y1
        y2 = conv3x3_relu(pad2_ref, patch2_ref, w2_ref) * wmask   # (mi, cout)

        # unnormalized activations out (lane-dense along Cout for realistic channel counts)
        y_ref[0, :, :] = y2

        # ---- BatchNorm2d partial statistics, accumulated across the grid axis ----
        @pl.when(n_id == 0)
        def _init_stats():
            sum_ref[...] = jnp.zeros_like(sum_ref)
            sumsq_ref[...] = jnp.zeros_like(sumsq_ref)

        sum_ref[...] += jnp.sum(y2, axis=0, keepdims=True)
        sumsq_ref[...] += jnp.sum(y2 * y2, axis=0, keepdims=True)

    return kernel


def _make_bn_kernel(count, transpose_out):
    """Kernel B: finalize BatchNorm (normalize + affine); trivially parallel over batch."""
    inv_cnt = 1.0 / float(count)

    def kernel(y_ref, sum_ref, sumsq_ref, gamma_ref, beta_ref, o_ref):
        mean = sum_ref[...] * inv_cnt                              # (1, cout)
        var = jnp.maximum(sumsq_ref[...] * inv_cnt - mean * mean, 0.0)
        scale = gamma_ref[...] * jax.lax.rsqrt(var + EPS)
        shift = beta_ref[...] - mean * scale
        y = y_ref[0, :, :] * scale + shift                         # (mi, cout)
        if transpose_out:   # small-channel case only; Cout >= 128 stays lane-dense as-is
            o_ref[0, :, :] = jnp.transpose(y, (1, 0)).astype(o_ref.dtype)
        else:
            o_ref[0, :, :] = y.astype(o_ref.dtype)

    return kernel


def down_forward(x_nchw, w1_oihw, w2_oihw, gamma, beta, *, compute_dtype=jnp.bfloat16):
    """MaxPool2d(2) -> DoubleConv forward.  PyTorch NCHW/OIHW layouts in and out."""
    n, cin, h, w = x_nchw.shape
    cout = w1_oihw.shape[0]
    assert h % 2 == 0 and w % 2 == 0, "MaxPool2d(2) path assumes even H, W"
    hp, wp = h // 2, w // 2
    wb = wp + 2
    mi = hp * wb
    rtot = mi + 2 * wb + 2           # flattened padded rows (+2 over-allocated guard rows)
    esz = jnp.dtype(compute_dtype).itemsize

    # Single permutation NCHW -> (N, dy, dx, Hp, Wp, Cin); pad pooled width by one zero on
    # each side and flatten (Hp, Wp+2) so the kernel's W-padding (and maxpool of it) is free.
    x = x_nchw.reshape(n, cin, hp, 2, wp, 2).transpose(0, 3, 5, 2, 4, 1)
    x = jnp.pad(x, ((0, 0), (0, 0), (0, 0), (0, 0), (1, 1), (0, 0)))
    x = x.reshape(n, 2, 2, mi, cin).astype(jnp.float32)

    # im2col weights: OIHW -> (ky, kx, Cin, Cout) -> (9*Cin, Cout), MXU-native dtype.
    w1 = jnp.transpose(w1_oihw, (2, 3, 1, 0)).reshape(9 * cin, cout).astype(compute_dtype)
    w2 = jnp.transpose(w2_oihw, (2, 3, 1, 0)).reshape(9 * cout, cout).astype(compute_dtype)

    # validity mask over flattened rows (0 on the two garbage columns of each row)
    col = jnp.arange(mi, dtype=jnp.int32) % wb
    wmask = ((col >= 1) & (col <= wp)).astype(jnp.float32).reshape(mi, 1)

    g = gamma.reshape(1, cout).astype(jnp.float32)
    b = beta.reshape(1, cout).astype(jnp.float32)

    # ---------- kernel A: pool + double conv (+ partial BN stats), grid over batch ----------
    scratch = [
        pltpu.VMEM((rtot, cin), jnp.float32),        # flattened padded conv1 input
        pltpu.VMEM((mi, 9 * cin), compute_dtype),    # conv1 im2col patch matrix
        pltpu.VMEM((rtot, cout), jnp.float32),       # flattened padded conv2 input
        pltpu.VMEM((mi, 9 * cout), compute_dtype),   # conv2 im2col patch matrix
    ]
    blocks_a = (4 * mi * cin * 4 + 9 * cin * cout * esz + 9 * cout * cout * esz
                + mi * 4 + mi * cout * 4 + 2 * cout * 4)
    scratch_a = (rtot * cin * 4 + mi * 9 * cin * esz
                 + rtot * cout * 4 + mi * 9 * cout * esz)
    vmem_a = int(min(100 * 2**20, max(2 * blocks_a + scratch_a + (2 << 20), 4 << 20)))

    y2, bn_sum, bn_sumsq = pl.pallas_call(
        _make_conv_kernel(hp, wp, cin, cout, compute_dtype),
        grid=(n,),
        in_specs=[
            pl.BlockSpec((1, 2, 2, mi, cin), lambda i: (i, 0, 0, 0, 0)),
            pl.BlockSpec((9 * cin, cout), lambda i: (0, 0)),
            pl.BlockSpec((9 * cout, cout), lambda i: (0, 0)),
            pl.BlockSpec((mi, 1), lambda i: (0, 0)),
        ],
        out_specs=(
            pl.BlockSpec((1, mi, cout), lambda i: (i, 0, 0)),
            pl.BlockSpec((1, cout), lambda i: (0, 0)),     # resident accumulator
            pl.BlockSpec((1, cout), lambda i: (0, 0)),     # resident accumulator
        ),
        out_shape=(
            jax.ShapeDtypeStruct((n, mi, cout), jnp.float32),
            jax.ShapeDtypeStruct((1, cout), jnp.float32),
            jax.ShapeDtypeStruct((1, cout), jnp.float32),
        ),
        scratch_shapes=scratch,
        compiler_params=pltpu.CompilerParams(
            dimension_semantics=("arbitrary",),   # BN stats accumulate across this axis
            vmem_limit_bytes=vmem_a),
    )(x, w1, w2, wmask)

    # ---------- kernel B: finalize BatchNorm (normalize + affine), parallel over batch ----------
    transpose_out = cout < 128       # keep lane-dense stores; transpose only for tiny Cout
    out_shape = (n, cout, mi) if transpose_out else (n, mi, cout)
    out_block = (1, cout, mi) if transpose_out else (1, mi, cout)
    blocks_b = 2 * mi * cout * 4 + 4 * cout * 4
    vmem_b = int(min(100 * 2**20, max(2 * blocks_b + (2 << 20), 4 << 20)))

    out = pl.pallas_call(
        _make_bn_kernel(n * hp * wp, transpose_out),
        grid=(n,),
        in_specs=[
            pl.BlockSpec((1, mi, cout), lambda i: (i, 0, 0)),
            pl.BlockSpec((1, cout), lambda i: (0, 0)),
            pl.BlockSpec((1, cout), lambda i: (0, 0)),
            pl.BlockSpec((1, cout), lambda i: (0, 0)),
            pl.BlockSpec((1, cout), lambda i: (0, 0)),
        ],
        out_specs=pl.BlockSpec(out_block, lambda i: (i, 0, 0)),
        out_shape=jax.ShapeDtypeStruct(out_shape, x_nchw.dtype),
        compiler_params=pltpu.CompilerParams(
            dimension_semantics=("parallel",),    # 2 TCs on v7x can split this axis
            vmem_limit_bytes=vmem_b),
    )(y2, bn_sum, bn_sumsq, g, b)

    # strip the 2 garbage columns per flattened row and return NCHW
    if transpose_out:
        return out.reshape(n, cout, hp, wb)[:, :, :, 1:wp + 1]
    return jnp.transpose(out.reshape(n, hp, wb, cout)[:, :, 1:wp + 1, :], (0, 3, 1, 2))


def down_reference(x_nchw, w1, w2, gamma, beta, compute_dtype=jnp.float32):
    """Pure-JAX reference of the PyTorch forward (for verification)."""
    xp = jax.lax.reduce_window(x_nchw, -jnp.inf, jax.lax.max,
                               (1, 1, 2, 2), (1, 1, 2, 2), "VALID")

    def conv(x, w):
        return jax.lax.conv_general_dilated(
            x.astype(compute_dtype), w.astype(compute_dtype),
            window_strides=(1, 1), padding=((1, 1), (1, 1)),
            dimension_numbers=("NCHW", "OIHW", "NCHW"),
            preferred_element_type=jnp.float32)

    y = jnp.maximum(conv(xp, w1), 0.0)
    y = jnp.maximum(conv(y, w2), 0.0)
    mean = jnp.mean(y, axis=(0, 2, 3), keepdims=True)
    var = jnp.mean((y - mean) ** 2, axis=(0, 2, 3), keepdims=True)
    y = (y - mean) / jnp.sqrt(var + EPS)
    return y * gamma.reshape(1, -1, 1, 1) + beta.reshape(1, -1, 1, 1)


if __name__ == "__main__":
    key = jax.random.PRNGKey(0)
    k1, k2, kx = jax.random.split(key, 3)

    N, Cin, Cout, H, W = 2, 4, 8, 16, 16
    x = jax.random.normal(kx, (N, Cin, H, W), jnp.float32)
    w1 = jax.random.normal(k1, (Cout, Cin, 3, 3), jnp.float32) * 0.1   # Conv2d #1 (no bias)
    w2 = jax.random.normal(k2, (Cout, Cout, 3, 3), jnp.float32) * 0.1  # Conv2d #2 (no bias)
    gamma = jnp.ones((Cout,), jnp.float32)   # BatchNorm2d weight (default init)
    beta = jnp.zeros((Cout,), jnp.float32)   # BatchNorm2d bias (default init)

    # Default path: bf16 MXU operands with f32 accumulation (per perf guidance);
    # verify against a dtype-matched reference.
    out = jax.block_until_ready(down_forward(x, w1, w2, gamma, beta))
    assert out.shape == (N, Cout, H // 2, W // 2), out.shape
    ref_bf16 = down_reference(x, w1, w2, gamma, beta, compute_dtype=jnp.bfloat16)
    err_bf16 = float(jnp.max(jnp.abs(out - ref_bf16)))
    assert jnp.allclose(out, ref_bf16, atol=3e-3, rtol=3e-3), f"bf16 max_err={err_bf16}"

    # f32 path: tight check against the exact module semantics.
    out32 = jax.block_until_ready(
        down_forward(x, w1, w2, gamma, beta, compute_dtype=jnp.float32))
    ref32 = down_reference(x, w1, w2, gamma, beta, compute_dtype=jnp.float32)
    err32 = float(jnp.max(jnp.abs(out32 - ref32)))
    assert jnp.allclose(out32, ref32, atol=2e-4, rtol=2e-4), f"f32 max_err={err32}"

    print("KERNEL_OK")
</pallas_src>

<mosaic_0001>
module attributes {stable_mosaic.version = 11 : i64} {
  func.func @kernel(%arg0: i32, %arg1: memref<1x2x2x80x4xf32, #tpu.memory_space<vmem>>, %arg2: memref<36x8xbf16, #tpu.memory_space<vmem>>, %arg3: memref<72x8xbf16, #tpu.memory_space<vmem>>, %arg4: memref<80x1xf32, #tpu.memory_space<vmem>>, %arg5: memref<1x80x8xf32, #tpu.memory_space<vmem>>, %arg6: memref<1x8xf32, #tpu.memory_space<vmem>>, %arg7: memref<1x8xf32, #tpu.memory_space<vmem>>, %arg8: memref<102x4xf32, #tpu.memory_space<vmem>>, %arg9: memref<80x36xbf16, #tpu.memory_space<vmem>>, %arg10: memref<102x8xf32, #tpu.memory_space<vmem>>, %arg11: memref<80x72xbf16, #tpu.memory_space<vmem>>) attributes {dimension_semantics = [#tpu.dimension_semantics<arbitrary>], iteration_bounds = array<i64: 2>, scalar_prefetch = 0 : i64, scratch_operands = 4 : i64, tpu.core_type = #tpu.core_type<tc>, window_params = [{transform_indices = @transform_0, window_bounds = array<i64: 1, 2, 2, 80, 4>}, {pipeline_mode = #tpu.pipeline_mode<synchronous>, transform_indices = @transform_1, window_bounds = array<i64: 36, 8>}, {pipeline_mode = #tpu.pipeline_mode<synchronous>, transform_indices = @transform_2, window_bounds = array<i64: 72, 8>}, {pipeline_mode = #tpu.pipeline_mode<synchronous>, transform_indices = @transform_3, window_bounds = array<i64: 80, 1>}, {transform_indices = @transform_4, window_bounds = array<i64: 1, 80, 8>}, {pipeline_mode = #tpu.pipeline_mode<synchronous>, transform_indices = @transform_5, window_bounds = array<i64: 1, 8>}, {pipeline_mode = #tpu.pipeline_mode<synchronous>, transform_indices = @transform_6, window_bounds = array<i64: 1, 8>}]} {
    %c0 = arith.constant 0 : index
    %c0_0 = arith.constant 0 : index
    %c0_1 = arith.constant 0 : index
    %c0_2 = arith.constant 0 : index
    %c0_3 = arith.constant 0 : index
    %0 = vector.load %arg1[%c0, %c0_0, %c0_1, %c0_2, %c0_3] : memref<1x2x2x80x4xf32, #tpu.memory_space<vmem>>, vector<1x1x1x80x4xf32>
    %1 = vector.shape_cast %0 : vector<1x1x1x80x4xf32> to vector<80x4xf32>
    %c0_4 = arith.constant 0 : index
    %c0_5 = arith.constant 0 : index
    %c1 = arith.constant 1 : index
    %c0_6 = arith.constant 0 : index
    %c0_7 = arith.constant 0 : index
    %2 = vector.load %arg1[%c0_4, %c0_5, %c1, %c0_6, %c0_7] : memref<1x2x2x80x4xf32, #tpu.memory_space<vmem>>, vector<1x1x1x80x4xf32>
    %3 = vector.shape_cast %2 : vector<1x1x1x80x4xf32> to vector<80x4xf32>
    %4 = arith.maximumf %1, %3 : vector<80x4xf32>
    %c0_8 = arith.constant 0 : index
    %c1_9 = arith.constant 1 : index
    %c0_10 = arith.constant 0 : index
    %c0_11 = arith.constant 0 : index
    %c0_12 = arith.constant 0 : index
    %5 = vector.load %arg1[%c0_8, %c1_9, %c0_10, %c0_11, %c0_12] : memref<1x2x2x80x4xf32, #tpu.memory_space<vmem>>, vector<1x1x1x80x4xf32>
    %6 = vector.shape_cast %5 : vector<1x1x1x80x4xf32> to vector<80x4xf32>
    %c0_13 = arith.constant 0 : index
    %c1_14 = arith.constant 1 : index
    %c1_15 = arith.constant 1 : index
    %c0_16 = arith.constant 0 : index
    %c0_17 = arith.constant 0 : index
    %7 = vector.load %arg1[%c0_13, %c1_14, %c1_15, %c0_16, %c0_17] : memref<1x2x2x80x4xf32, #tpu.memory_space<vmem>>, vector<1x1x1x80x4xf32>
    %8 = vector.shape_cast %7 : vector<1x1x1x80x4xf32> to vector<80x4xf32>
    %9 = arith.maximumf %6, %8 : vector<80x4xf32>
    %10 = arith.maximumf %4, %9 : vector<80x4xf32>
    %c0_i32 = arith.constant 0 : i32
    %11 = arith.cmpi eq, %arg0, %c0_i32 : i32
    %12 = arith.extui %11 : i1 to i32
    %c0_i32_18 = arith.constant 0 : i32
    %13 = arith.cmpi ne, %12, %c0_i32_18 : i32
    scf.if %13 {
      %cst_106 = arith.constant 0.000000e+00 : f32
      %102 = vector.broadcast %cst_106 : f32 to vector<11x4xf32>
      %c0_107 = arith.constant 0 : index
      %c0_108 = arith.constant 0 : index
      %103 = vector.load %arg8[%c0_107, %c0_108] : memref<102x4xf32, #tpu.memory_space<vmem>>, vector<11x4xf32>
      tpu.vector_store %arg8[%c0_107, %c0_108], %102 {strides = array<i32>} : memref<102x4xf32, #tpu.memory_space<vmem>>, vector<11x4xf32>,
      %cst_109 = arith.constant 0.000000e+00 : f32
      %104 = vector.broadcast %cst_109 : f32 to vector<11x4xf32>
      %c91 = arith.constant 91 : index
      %c0_110 = arith.constant 0 : index
      %105 = vector.load %arg8[%c91, %c0_110] : memref<102x4xf32, #tpu.memory_space<vmem>>, vector<11x4xf32>
      tpu.vector_store %arg8[%c91, %c0_110], %104 {strides = array<i32>} : memref<102x4xf32, #tpu.memory_space<vmem>>, vector<11x4xf32>,
      %cst_111 = arith.constant 0.000000e+00 : f32
      %106 = vector.broadcast %cst_111 : f32 to vector<11x8xf32>
      %c0_112 = arith.constant 0 : index
      %c0_113 = arith.constant 0 : index
      %107 = vector.load %arg10[%c0_112, %c0_113] : memref<102x8xf32, #tpu.memory_space<vmem>>, vector<11x8xf32>
      tpu.vector_store %arg10[%c0_112, %c0_113], %106 {strides = array<i32>} : memref<102x8xf32, #tpu.memory_space<vmem>>, vector<11x8xf32>,
      %cst_114 = arith.constant 0.000000e+00 : f32
      %108 = vector.broadcast %cst_114 : f32 to vector<11x8xf32>
      %c91_115 = arith.constant 91 : index
      %c0_116 = arith.constant 0 : index
      %109 = vector.load %arg10[%c91_115, %c0_116] : memref<102x8xf32, #tpu.memory_space<vmem>>, vector<11x8xf32>
      tpu.vector_store %arg10[%c91_115, %c0_116], %108 {strides = array<i32>} : memref<102x8xf32, #tpu.memory_space<vmem>>, vector<11x8xf32>,
    } else {
    }
    %c0_19 = arith.constant 0 : index
    %c0_20 = arith.constant 0 : index
    %14 = vector.load %arg4[%c0_19, %c0_20] : memref<80x1xf32, #tpu.memory_space<vmem>>, vector<80x1xf32>
    %c11 = arith.constant 11 : index
    %c0_21 = arith.constant 0 : index
    %15 = vector.load %arg8[%c11, %c0_21] : memref<102x4xf32, #tpu.memory_space<vmem>>, vector<80x4xf32>
    tpu.vector_store %arg8[%c11, %c0_21], %10 {strides = array<i32>} : memref<102x4xf32, #tpu.memory_space<vmem>>, vector<80x4xf32>,
    %c0_22 = arith.constant 0 : index
    %c0_23 = arith.constant 0 : index
    %16 = vector.load %arg8[%c0_22, %c0_23] : memref<102x4xf32, #tpu.memory_space<vmem>>, vector<80x4xf32>
    %17 = arith.truncf %16 : vector<80x4xf32> to vector<80x4xbf16>
    %c0_24 = arith.constant 0 : index
    %c0_25 = arith.constant 0 : index
    %18 = vector.load %arg9[%c0_24, %c0_25] : memref<80x36xbf16, #tpu.memory_space<vmem>>, vector<80x4xbf16>
    tpu.vector_store %arg9[%c0_24, %c0_25], %17 {strides = array<i32>} : memref<80x36xbf16, #tpu.memory_space<vmem>>, vector<80x4xbf16>,
    %c1_26 = arith.constant 1 : index
    %c0_27 = arith.constant 0 : index
    %19 = vector.load %arg8[%c1_26, %c0_27] : memref<102x4xf32, #tpu.memory_space<vmem>>, vector<80x4xf32>
    %20 = arith.truncf %19 : vector<80x4xf32> to vector<80x4xbf16>
    %c0_28 = arith.constant 0 : index
    %c4 = arith.constant 4 : index
    %21 = vector.load %arg9[%c0_28, %c4] : memref<80x36xbf16, #tpu.memory_space<vmem>>, vector<80x4xbf16>
    tpu.vector_store %arg9[%c0_28, %c4], %20 {strides = array<i32>} : memref<80x36xbf16, #tpu.memory_space<vmem>>, vector<80x4xbf16>,
    %c2 = arith.constant 2 : index
    %c0_29 = arith.constant 0 : index
    %22 = vector.load %arg8[%c2, %c0_29] : memref<102x4xf32, #tpu.memory_space<vmem>>, vector<80x4xf32>
    %23 = arith.truncf %22 : vector<80x4xf32> to vector<80x4xbf16>
    %c0_30 = arith.constant 0 : index
    %c8 = arith.constant 8 : index
    %24 = vector.load %arg9[%c0_30, %c8] : memref<80x36xbf16, #tpu.memory_space<vmem>>, vector<80x4xbf16>
    tpu.vector_store %arg9[%c0_30, %c8], %23 {strides = array<i32>} : memref<80x36xbf16, #tpu.memory_space<vmem>>, vector<80x4xbf16>,
    %c10 = arith.constant 10 : index
    %c0_31 = arith.constant 0 : index
    %25 = vector.load %arg8[%c10, %c0_31] : memref<102x4xf32, #tpu.memory_space<vmem>>, vector<80x4xf32>
    %26 = arith.truncf %25 : vector<80x4xf32> to vector<80x4xbf16>
    %c0_32 = arith.constant 0 : index
    %c12 = arith.constant 12 : index
    %27 = vector.load %arg9[%c0_32, %c12] : memref<80x36xbf16, #tpu.memory_space<vmem>>, vector<80x4xbf16>
    tpu.vector_store %arg9[%c0_32, %c12], %26 {strides = array<i32>} : memref<80x36xbf16, #tpu.memory_space<vmem>>, vector<80x4xbf16>,
    %c11_33 = arith.constant 11 : index
    %c0_34 = arith.constant 0 : index
    %28 = vector.load %arg8[%c11_33, %c0_34] : memref<102x4xf32, #tpu.memory_space<vmem>>, vector<80x4xf32>
    %29 = arith.truncf %28 : vector<80x4xf32> to vector<80x4xbf16>
    %c0_35 = arith.constant 0 : index
    %c16 = arith.constant 16 : index
    %30 = vector.load %arg9[%c0_35, %c16] : memref<80x36xbf16, #tpu.memory_space<vmem>>, vector<80x4xbf16>
    tpu.vector_store %arg9[%c0_35, %c16], %29 {strides = array<i32>} : memref<80x36xbf16, #tpu.memory_space<vmem>>, vector<80x4xbf16>,
    %c12_36 = arith.constant 12 : index
    %c0_37 = arith.constant 0 : index
    %31 = vector.load %arg8[%c12_36, %c0_37] : memref<102x4xf32, #tpu.memory_space<vmem>>, vector<80x4xf32>
    %32 = arith.truncf %31 : vector<80x4xf32> to vector<80x4xbf16>
    %c0_38 = arith.constant 0 : index
    %c20 = arith.constant 20 : index
    %33 = vector.load %arg9[%c0_38, %c20] : memref<80x36xbf16, #tpu.memory_space<vmem>>, vector<80x4xbf16>
    tpu.vector_store %arg9[%c0_38, %c20], %32 {strides = array<i32>} : memref<80x36xbf16, #tpu.memory_space<vmem>>, vector<80x4xbf16>,
    %c20_39 = arith.constant 20 : index
    %c0_40 = arith.constant 0 : index
    %34 = vector.load %arg8[%c20_39, %c0_40] : memref<102x4xf32, #tpu.memory_space<vmem>>, vector<80x4xf32>
    %35 = arith.truncf %34 : vector<80x4xf32> to vector<80x4xbf16>
    %c0_41 = arith.constant 0 : index
    %c24 = arith.constant 24 : index
    %36 = vector.load %arg9[%c0_41, %c24] : memref<80x36xbf16, #tpu.memory_space<vmem>>, vector<80x4xbf16>
    tpu.vector_store %arg9[%c0_41, %c24], %35 {strides = array<i32>} : memref<80x36xbf16, #tpu.memory_space<vmem>>, vector<80x4xbf16>,
    %c21 = arith.constant 21 : index
    %c0_42 = arith.constant 0 : index
    %37 = vector.load %arg8[%c21, %c0_42] : memref<102x4xf32, #tpu.memory_space<vmem>>, vector<80x4xf32>
    %38 = arith.truncf %37 : vector<80x4xf32> to vector<80x4xbf16>
    %c0_43 = arith.constant 0 : index
    %c28 = arith.constant 28 : index
    %39 = vector.load %arg9[%c0_43, %c28] : memref<80x36xbf16, #tpu.memory_space<vmem>>, vector<80x4xbf16>
    tpu.vector_store %arg9[%c0_43, %c28], %38 {strides = array<i32>} : memref<80x36xbf16, #tpu.memory_space<vmem>>, vector<80x4xbf16>,
    %c22 = arith.constant 22 : index
    %c0_44 = arith.constant 0 : index
    %40 = vector.load %arg8[%c22, %c0_44] : memref<102x4xf32, #tpu.memory_space<vmem>>, vector<80x4xf32>
    %41 = arith.truncf %40 : vector<80x4xf32> to vector<80x4xbf16>
    %c0_45 = arith.constant 0 : index
    %c32 = arith.constant 32 : index
    %42 = vector.load %arg9[%c0_45, %c32] : memref<80x36xbf16, #tpu.memory_space<vmem>>, vector<80x4xbf16>
    tpu.vector_store %arg9[%c0_45, %c32], %41 {strides = array<i32>} : memref<80x36xbf16, #tpu.memory_space<vmem>>, vector<80x4xbf16>,
    %c0_46 = arith.constant 0 : index
    %c0_47 = arith.constant 0 : index
    %43 = vector.load %arg9[%c0_46, %c0_47] : memref<80x36xbf16, #tpu.memory_space<vmem>>, vector<80x36xbf16>
    %c0_48 = arith.constant 0 : index
    %c0_49 = arith.constant 0 : index
    %44 = vector.load %arg2[%c0_48, %c0_49] : memref<36x8xbf16, #tpu.memory_space<vmem>>, vector<36x8xbf16>
    %cst = arith.constant dense<0.000000e+00> : vector<80x8xf32>
    %45 = tpu.matmul %43, %44, %cst {dimension_numbers = #tpu.dot_dimension_numbers<[1], [0], [0], [1], [0, 0, 1, 1], [], []>} : vector<80x36xbf16>, vector<36x8xbf16>, vector<80x8xf32> -> vector<80x8xf32>
    %cst_50 = arith.constant 0.000000e+00 : f32
    %46 = vector.broadcast %cst_50 : f32 to vector<80x8xf32>
    %47 = arith.maximumf %45, %46 : vector<80x8xf32>
    %48 = vector.broadcast %14 : vector<80x1xf32> to vector<80x8xf32>
    %49 = arith.mulf %47, %48 : vector<80x8xf32>
    %c11_51 = arith.constant 11 : index
    %c0_52 = arith.constant 0 : index
    %50 = vector.load %arg10[%c11_51, %c0_52] : memref<102x8xf32, #tpu.memory_space<vmem>>, vector<80x8xf32>
    tpu.vector_store %arg10[%c11_51, %c0_52], %49 {strides = array<i32>} : memref<102x8xf32, #tpu.memory_space<vmem>>, vector<80x8xf32>,
    %c0_53 = arith.constant 0 : index
    %c0_54 = arith.constant 0 : index
    %51 = vector.load %arg10[%c0_53, %c0_54] : memref<102x8xf32, #tpu.memory_space<vmem>>, vector<80x8xf32>
    %52 = arith.truncf %51 : vector<80x8xf32> to vector<80x8xbf16>
    %c0_55 = arith.constant 0 : index
    %c0_56 = arith.constant 0 : index
    %53 = vector.load %arg11[%c0_55, %c0_56] : memref<80x72xbf16, #tpu.memory_space<vmem>>, vector<80x8xbf16>
    tpu.vector_store %arg11[%c0_55, %c0_56], %52 {strides = array<i32>} : memref<80x72xbf16, #tpu.memory_space<vmem>>, vector<80x8xbf16>,
    %c1_57 = arith.constant 1 : index
    %c0_58 = arith.constant 0 : index
    %54 = vector.load %arg10[%c1_57, %c0_58] : memref<102x8xf32, #tpu.memory_space<vmem>>, vector<80x8xf32>
    %55 = arith.truncf %54 : vector<80x8xf32> to vector<80x8xbf16>
    %c0_59 = arith.constant 0 : index
    %c8_60 = arith.constant 8 : index
    %56 = vector.load %arg11[%c0_59, %c8_60] : memref<80x72xbf16, #tpu.memory_space<vmem>>, vector<80x8xbf16>
    tpu.vector_store %arg11[%c0_59, %c8_60], %55 {strides = array<i32>} : memref<80x72xbf16, #tpu.memory_space<vmem>>, vector<80x8xbf16>,
    %c2_61 = arith.constant 2 : index
    %c0_62 = arith.constant 0 : index
    %57 = vector.load %arg10[%c2_61, %c0_62] : memref<102x8xf32, #tpu.memory_space<vmem>>, vector<80x8xf32>
    %58 = arith.truncf %57 : vector<80x8xf32> to vector<80x8xbf16>
    %c0_63 = arith.constant 0 : index
    %c16_64 = arith.constant 16 : index
    %59 = vector.load %arg11[%c0_63, %c16_64] : memref<80x72xbf16, #tpu.memory_space<vmem>>, vector<80x8xbf16>
    tpu.vector_store %arg11[%c0_63, %c16_64], %58 {strides = array<i32>} : memref<80x72xbf16, #tpu.memory_space<vmem>>, vector<80x8xbf16>,
    %c10_65 = arith.constant 10 : index
    %c0_66 = arith.constant 0 : index
    %60 = vector.load %arg10[%c10_65, %c0_66] : memref<102x8xf32, #tpu.memory_space<vmem>>, vector<80x8xf32>
    %61 = arith.truncf %60 : vector<80x8xf32> to vector<80x8xbf16>
    %c0_67 = arith.constant 0 : index
    %c24_68 = arith.constant 24 : index
    %62 = vector.load %arg11[%c0_67, %c24_68] : memref<80x72xbf16, #tpu.memory_space<vmem>>, vector<80x8xbf16>
    tpu.vector_store %arg11[%c0_67, %c24_68], %61 {strides = array<i32>} : memref<80x72xbf16, #tpu.memory_space<vmem>>, vector<80x8xbf16>,
    %c11_69 = arith.constant 11 : index
    %c0_70 = arith.constant 0 : index
    %63 = vector.load %arg10[%c11_69, %c0_70] : memref<102x8xf32, #tpu.memory_space<vmem>>, vector<80x8xf32>
    %64 = arith.truncf %63 : vector<80x8xf32> to vector<80x8xbf16>
    %c0_71 = arith.constant 0 : index
    %c32_72 = arith.constant 32 : index
    %65 = vector.load %arg11[%c0_71, %c32_72] : memref<80x72xbf16, #tpu.memory_space<vmem>>, vector<80x8xbf16>
    tpu.vector_store %arg11[%c0_71, %c32_72], %64 {strides = array<i32>} : memref<80x72xbf16, #tpu.memory_space<vmem>>, vector<80x8xbf16>,
    %c12_73 = arith.constant 12 : index
    %c0_74 = arith.constant 0 : index
    %66 = vector.load %arg10[%c12_73, %c0_74] : memref<102x8xf32, #tpu.memory_space<vmem>>, vector<80x8xf32>
    %67 = arith.truncf %66 : vector<80x8xf32> to vector<80x8xbf16>
    %c0_75 = arith.constant 0 : index
    %c40 = arith.constant 40 : index
    %68 = vector.load %arg11[%c0_75, %c40] : memref<80x72xbf16, #tpu.memory_space<vmem>>, vector<80x8xbf16>
    tpu.vector_store %arg11[%c0_75, %c40], %67 {strides = array<i32>} : memref<80x72xbf16, #tpu.memory_space<vmem>>, vector<80x8xbf16>,
    %c20_76 = arith.constant 20 : index
    %c0_77 = arith.constant 0 : index
    %69 = vector.load %arg10[%c20_76, %c0_77] : memref<102x8xf32, #tpu.memory_space<vmem>>, vector<80x8xf32>
    %70 = arith.truncf %69 : vector<80x8xf32> to vector<80x8xbf16>
    %c0_78 = arith.constant 0 : index
    %c48 = arith.constant 48 : index
    %71 = vector.load %arg11[%c0_78, %c48] : memref<80x72xbf16, #tpu.memory_space<vmem>>, vector<80x8xbf16>
    tpu.vector_store %arg11[%c0_78, %c48], %70 {strides = array<i32>} : memref<80x72xbf16, #tpu.memory_space<vmem>>, vector<80x8xbf16>,
    %c21_79 = arith.constant 21 : index
    %c0_80 = arith.constant 0 : index
    %72 = vector.load %arg10[%c21_79, %c0_80] : memref<102x8xf32, #tpu.memory_space<vmem>>, vector<80x8xf32>
    %73 = arith.truncf %72 : vector<80x8xf32> to vector<80x8xbf16>
    %c0_81 = arith.constant 0 : index
    %c56 = arith.constant 56 : index
    %74 = vector.load %arg11[%c0_81, %c56] : memref<80x72xbf16, #tpu.memory_space<vmem>>, vector<80x8xbf16>
    tpu.vector_store %arg11[%c0_81, %c56], %73 {strides = array<i32>} : memref<80x72xbf16, #tpu.memory_space<vmem>>, vector<80x8xbf16>,
    %c22_82 = arith.constant 22 : index
    %c0_83 = arith.constant 0 : index
    %75 = vector.load %arg10[%c22_82, %c0_83] : memref<102x8xf32, #tpu.memory_space<vmem>>, vector<80x8xf32>
    %76 = arith.truncf %75 : vector<80x8xf32> to vector<80x8xbf16>
    %c0_84 = arith.constant 0 : index
    %c64 = arith.constant 64 : index
    %77 = vector.load %arg11[%c0_84, %c64] : memref<80x72xbf16, #tpu.memory_space<vmem>>, vector<80x8xbf16>
    tpu.vector_store %arg11[%c0_84, %c64], %76 {strides = array<i32>} : memref<80x72xbf16, #tpu.memory_space<vmem>>, vector<80x8xbf16>,
    %c0_85 = arith.constant 0 : index
    %c0_86 = arith.constant 0 : index
    %78 = vector.load %arg11[%c0_85, %c0_86] : memref<80x72xbf16, #tpu.memory_space<vmem>>, vector<80x72xbf16>
    %c0_87 = arith.constant 0 : index
    %c0_88 = arith.constant 0 : index
    %79 = vector.load %arg3[%c0_87, %c0_88] : memref<72x8xbf16, #tpu.memory_space<vmem>>, vector<72x8xbf16>
    %cst_89 = arith.constant dense<0.000000e+00> : vector<80x8xf32>
    %80 = tpu.matmul %78, %79, %cst_89 {dimension_numbers = #tpu.dot_dimension_numbers<[1], [0], [0], [1], [0, 0, 1, 1], [], []>} : vector<80x72xbf16>, vector<72x8xbf16>, vector<80x8xf32> -> vector<80x8xf32>
    %cst_90 = arith.constant 0.000000e+00 : f32
    %81 = vector.broadcast %cst_90 : f32 to vector<80x8xf32>
    %82 = arith.maximumf %80, %81 : vector<80x8xf32>
    %83 = vector.broadcast %14 : vector<80x1xf32> to vector<80x8xf32>
    %84 = arith.mulf %82, %83 : vector<80x8xf32>
    %c0_91 = arith.constant 0 : index
    %c0_92 = arith.constant 0 : index
    %c0_93 = arith.constant 0 : index
    %85 = vector.load %arg5[%c0_91, %c0_92, %c0_93] : memref<1x80x8xf32, #tpu.memory_space<vmem>>, vector<1x80x8xf32>
    %86 = vector.shape_cast %85 : vector<1x80x8xf32> to vector<80x8xf32>
    %87 = vector.shape_cast %84 : vector<80x8xf32> to vector<1x80x8xf32>
    tpu.vector_store %arg5[%c0_91, %c0_92, %c0_93], %87 {strides = array<i32>} : memref<1x80x8xf32, #tpu.memory_space<vmem>>, vector<1x80x8xf32>,
    %c0_i32_94 = arith.constant 0 : i32
    %88 = arith.cmpi eq, %arg0, %c0_i32_94 : i32
    %89 = arith.extui %88 : i1 to i32
    %c0_i32_95 = arith.constant 0 : i32
    %90 = arith.cmpi ne, %89, %c0_i32_95 : i32
    scf.if %90 {
      %cst_106 = arith.constant 0.000000e+00 : f32
      %102 = vector.broadcast %cst_106 : f32 to vector<1x8xf32>
      %c0_107 = arith.constant 0 : index
      %c0_108 = arith.constant 0 : index
      %103 = vector.load %arg6[%c0_107, %c0_108] : memref<1x8xf32, #tpu.memory_space<vmem>>, vector<1x8xf32>
      tpu.vector_store %arg6[%c0_107, %c0_108], %102 {strides = array<i32>} : memref<1x8xf32, #tpu.memory_space<vmem>>, vector<1x8xf32>,
      %cst_109 = arith.constant 0.000000e+00 : f32
      %104 = vector.broadcast %cst_109 : f32 to vector<1x8xf32>
      %c0_110 = arith.constant 0 : index
      %c0_111 = arith.constant 0 : index
      %105 = vector.load %arg7[%c0_110, %c0_111] : memref<1x8xf32, #tpu.memory_space<vmem>>, vector<1x8xf32>
      tpu.vector_store %arg7[%c0_110, %c0_111], %104 {strides = array<i32>} : memref<1x8xf32, #tpu.memory_space<vmem>>, vector<1x8xf32>,
    } else {
    }
    %c0_96 = arith.constant 0 : index
    %c0_97 = arith.constant 0 : index
    %91 = vector.load %arg6[%c0_96, %c0_97] : memref<1x8xf32, #tpu.memory_space<vmem>>, vector<1x8xf32>
    %cst_98 = arith.constant dense<0.000000e+00> : vector<8xf32>
    %92 = vector.multi_reduction <add>, %84, %cst_98 [0] : vector<80x8xf32> to vector<8xf32>
    %93 = vector.shape_cast %92 : vector<8xf32> to vector<1x8xf32>
    %94 = arith.addf %91, %93 : vector<1x8xf32>
    %c0_99 = arith.constant 0 : index
    %c0_100 = arith.constant 0 : index
    %95 = vector.load %arg6[%c0_99, %c0_100] : memref<1x8xf32, #tpu.memory_space<vmem>>, vector<1x8xf32>
    tpu.vector_store %arg6[%c0_99, %c0_100], %94 {strides = array<i32>} : memref<1x8xf32, #tpu.memory_space<vmem>>, vector<1x8xf32>,
    %c0_101 = arith.constant 0 : index
    %c0_102 = arith.constant 0 : index
    %96 = vector.load %arg7[%c0_101, %c0_102] : memref<1x8xf32, #tpu.memory_space<vmem>>, vector<1x8xf32>
    %97 = arith.mulf %84, %84 : vector<80x8xf32>
    %cst_103 = arith.constant dense<0.000000e+00> : vector<8xf32>
    %98 = vector.multi_reduction <add>, %97, %cst_103 [0] : vector<80x8xf32> to vector<8xf32>
    %99 = vector.shape_cast %98 : vector<8xf32> to vector<1x8xf32>
    %100 = arith.addf %96, %99 : vector<1x8xf32>
    %c0_104 = arith.constant 0 : index
    %c0_105 = arith.constant 0 : index
    %101 = vector.load %arg7[%c0_104, %c0_105] : memref<1x8xf32, #tpu.memory_space<vmem>>, vector<1x8xf32>
    tpu.vector_store %arg7[%c0_104, %c0_105], %100 {strides = array<i32>} : memref<1x8xf32, #tpu.memory_space<vmem>>, vector<1x8xf32>,
    return
  }
  func.func @transform_0(%arg0: i32) -> (i32, i32, i32, i32, i32) {
    %c0_i32 = arith.constant 0 : i32
    %c0_i32_0 = arith.constant 0 : i32
    %c0_i32_1 = arith.constant 0 : i32
    %c0_i32_2 = arith.constant 0 : i32
    %c0_i32_3 = arith.constant 0 : i32
    return %arg0, %c0_i32, %c0_i32_0, %c0_i32_1, %c0_i32_2 : i32, i32, i32, i32, i32
  }
  func.func @transform_1(%arg0: i32) -> (i32, i32) {
    %c0_i32 = arith.constant 0 : i32
    %c0_i32_0 = arith.constant 0 : i32
    %c0_i32_1 = arith.constant 0 : i32
    return %c0_i32, %c0_i32_0 : i32, i32
  }
  func.func @transform_2(%arg0: i32) -> (i32, i32) {
    %c0_i32 = arith.constant 0 : i32
    %c0_i32_0 = arith.constant 0 : i32
    %c0_i32_1 = arith.constant 0 : i32
    return %c0_i32, %c0_i32_0 : i32, i32
  }
  func.func @transform_3(%arg0: i32) -> (i32, i32) {
    %c0_i32 = arith.constant 0 : i32
    %c0_i32_0 = arith.constant 0 : i32
    %c0_i32_1 = arith.constant 0 : i32
    return %c0_i32, %c0_i32_0 : i32, i32
  }
  func.func @transform_4(%arg0: i32) -> (i32, i32, i32) {
    %c0_i32 = arith.constant 0 : i32
    %c0_i32_0 = arith.constant 0 : i32
    %c0_i32_1 = arith.constant 0 : i32
    return %arg0, %c0_i32, %c0_i32_0 : i32, i32, i32
  }
  func.func @transform_5(%arg0: i32) -> (i32, i32) {
    %c0_i32 = arith.constant 0 : i32
    %c0_i32_0 = arith.constant 0 : i32
    %c0_i32_1 = arith.constant 0 : i32
    return %c0_i32, %c0_i32_0 : i32, i32
  }
  func.func @transform_6(%arg0: i32) -> (i32, i32) {
    %c0_i32 = arith.constant 0 : i32
    %c0_i32_0 = arith.constant 0 : i32
    %c0_i32_1 = arith.constant 0 : i32
    return %c0_i32, %c0_i32_0 : i32, i32
  }
}

</mosaic_0001>

<llo_original>
// kernel: tpu_custom_call.1
$region0: #{tpu_custom_call.1}
  #allocation0 [shape = 'u32[]', space=smem, size = 0x4, offset = 0x4, fixed_abs, tag = 'smem constant byte address 0x4 - core index']
  #allocation1 [shape = 'u32[144,128]{1,0:T(1,128)}', space=vmem, size = 0x12000, scoped, tag = 'internal scratch']
  #allocation2 [shape = 'f32[102,4]{1,0:T(8,128)}', space=vmem, size = 0xd000, scoped, tag = 'scratch operand']
  #allocation3 [shape = 'bf16[80,36]{1,0:T(8,128)(2,1)}', space=vmem, size = 0x5000, scoped, tag = 'scratch operand']
  #allocation4 [shape = 'f32[102,8]{1,0:T(8,128)}', space=vmem, size = 0xd000, scoped, tag = 'scratch operand']
  #allocation5 [shape = 'bf16[80,72]{1,0:T(8,128)(2,1)}', space=vmem, size = 0x5000, scoped, tag = 'scratch operand']
  %s0 = inlined_call_operand.vmem [shape: f32[2,2,2,80,4], index: 0, kind: input, shape index: {}]
  %s1 = inlined_call_operand.vmem [shape: bf16[36,8], index: 1, kind: input, shape index: {}]
  %s2 = inlined_call_operand.vmem [shape: bf16[72,8], index: 2, kind: input, shape index: {}]
  %s3 = inlined_call_operand.vmem [shape: f32[80,1], index: 3, kind: input, shape index: {}]
  %s4 = inlined_call_operand.vmem [shape: f32[2,80,8], index: 4, kind: output, shape index: {0}]
  %s5 = inlined_call_operand.hbm [shape: f32[1,8], index: 5, kind: output, shape index: {1}]
  %s6 = inlined_call_operand.hbm [shape: f32[1,8], index: 6, kind: output, shape index: {2}]
  %7 = xla_tuple %s4, %s5, %s6
  %s8 = sld [smem:[#allocation0]]
  $region73: #{tpu_custom_call.1} parent=0
    _
  %s10 = ssub.s32 1, %s8
  %s11 = scalar_select 0, %s10, %s8
  $region1: #{tpu_custom_call.1} parent=0
    #allocation6 [shape = 'u8[512]{0}', space=vmem, size = 0x400, scoped, tag = 'output window, operand 1, single buffered']
    #allocation7 [shape = 's32[2]{0}', space=sflag, size = 0x8, scoped, tag = 'scoped memory for tpu_custom_call.1']
    #allocation8 [shape = 'u8[512]{0}', space=vmem, size = 0x400, scoped, tag = 'output window, operand 2, single buffered']
    #allocation9 [shape = 's32[1]{0}', space=sflag, size = 0x4, scoped, tag = 'scoped memory for tpu_custom_call.1']
    %12 = vsyncpa [#allocation7], 0
    %13 = vsyncpa [#allocation9], 0
    loop: start=0, step=1, limit=4
    $region2: #{tpu_custom_call.1} parent=1 // loop_pre_header
      _
    $region3: #{tpu_custom_call.1} parent=1 // loop_header
      %s15 = sphi 0, %s19
      %p16 = scmp.ge.s32.totalorder %s15, 4
      %s25 = sphi 0, %s27
      %s28 = sphi 0, %s25
      %s29 = sphi 0, %s28
      %s45 = sphi 0, %s29
      %s49 = sphi 0, %s49
      %s51 = sphi 0, %s49
      %s52 = sphi 0, %s51
      %s66 = sphi 0, %s52
      %s70 = sphi 0, %s70
      %s72 = sphi 0, %s70
      %s73 = sphi 0, %s72
      %s87 = sphi 0, %s73
      %s91 = sphi 0, %s91
      %s93 = sphi 0, %s91
      %s94 = sphi 0, %s93
      %s108 = sphi 0, %s94
      %s114 = sphi 0, %s116
      %s117 = sphi 0, %s114
      %s118 = sphi 0, %s117
      %s134 = sphi 0, %s118
      %s138 = sphi 0, %s138
      %s140 = sphi 0, %s138
      %s141 = sphi 0, %s140
      %s155 = sphi 0, %s141
      %s159 = sphi 0, %s159
      %s161 = sphi 0, %s159
      %s162 = sphi 0, %s161
      %s176 = sphi 0, %s162
    $region4: #{tpu_custom_call.1} parent=1 // loop_header_branch
      %18 = sbr.rel (%p16) target = $region8
    $region5: #{tpu_custom_call.1} parent=1 // loop_body
      %s20 = ssub.s32 %s15, 1
      %s21 = ssub.s32 %s15, 2
      %s22 = sadd.s32 %s15, 1
      %s23 = ssub.s32 %s15, %s22
      %p24 = scmp.eq.s32.totalorder %s23, 0
      %s26 = sadd.s32 %s25, 1
      %s27 = scalar_select %p24, %s25, %s26
      %p30 = pneg %p24
      %p31 = scmp.eq.s32.totalorder %s15, 1
      %p32 = por %p30, %p31
      %p33 = scmp.ne.s32.totalorder %s25, %s28
      %p34 = scmp.eq.s32.totalorder %s15, 0
      %p35 = por %p33, %p34
      %p36 = scmp.ne.s32.totalorder %s25, %s28
      %p37 = scmp.eq.s32.totalorder %s20, 1
      %p38 = por %p36, %p37
      %p39 = scmp.ne.s32.totalorder %s28, %s29
      %p40 = scmp.eq.s32.totalorder %s20, 0
      %p41 = por %p39, %p40
      %p42 = scmp.ne.s32.totalorder %s28, %s29
      %p43 = scmp.eq.s32.totalorder %s21, 1
      %p44 = por %p42, %p43
      %p46 = scmp.ne.s32.totalorder %s29, %s45
      %p47 = scmp.eq.s32.totalorder %s21, 0
      %p48 = por %p46, %p47
      %s50 = sadd.s32 %s49, 1
      %p53 = scmp.eq.s32.totalorder %s15, 1
      %p54 = scmp.ne.s32.totalorder %s49, %s51
      %p55 = scmp.eq.s32.totalorder %s15, 0
      %p56 = por %p54, %p55
      %p57 = scmp.ne.s32.totalorder %s49, %s51
      %p58 = scmp.eq.s32.totalorder %s20, 1
      %p59 = por %p57, %p58
      %p60 = scmp.ne.s32.totalorder %s51, %s52
      %p61 = scmp.eq.s32.totalorder %s20, 0
      %p62 = por %p60, %p61
      %p63 = scmp.ne.s32.totalorder %s51, %s52
      %p64 = scmp.eq.s32.totalorder %s21, 1
      %p65 = por %p63, %p64
      %p67 = scmp.ne.s32.totalorder %s52, %s66
      %p68 = scmp.eq.s32.totalorder %s21, 0
      %p69 = por %p67, %p68
      %s71 = sadd.s32 %s70, 1
      %p74 = scmp.eq.s32.totalorder %s15, 1
      %p75 = scmp.ne.s32.totalorder %s70, %s72
      %p76 = scmp.eq.s32.totalorder %s15, 0
      %p77 = por %p75, %p76
      %p78 = scmp.ne.s32.totalorder %s70, %s72
      %p79 = scmp.eq.s32.totalorder %s20, 1
      %p80 = por %p78, %p79
      %p81 = scmp.ne.s32.totalorder %s72, %s73
      %p82 = scmp.eq.s32.totalorder %s20, 0
      %p83 = por %p81, %p82
      %p84 = scmp.ne.s32.totalorder %s72, %s73
      %p85 = scmp.eq.s32.totalorder %s21, 1
      %p86 = por %p84, %p85
      %p88 = scmp.ne.s32.totalorder %s73, %s87
      %p89 = scmp.eq.s32.totalorder %s21, 0
      %p90 = por %p88, %p89
      %s92 = sadd.s32 %s91, 1
      %p95 = scmp.eq.s32.totalorder %s15, 1
      %p96 = scmp.ne.s32.totalorder %s91, %s93
      %p97 = scmp.eq.s32.totalorder %s15, 0
      %p98 = por %p96, %p97
      %p99 = scmp.ne.s32.totalorder %s91, %s93
      %p100 = scmp.eq.s32.totalorder %s20, 1
      %p101 = por %p99, %p100
      %p102 = scmp.ne.s32.totalorder %s93, %s94
      %p103 = scmp.eq.s32.totalorder %s20, 0
      %p104 = por %p102, %p103
      %p105 = scmp.ne.s32.totalorder %s93, %s94
      %p106 = scmp.eq.s32.totalorder %s21, 1
      %p107 = por %p105, %p106
      %p109 = scmp.ne.s32.totalorder %s94, %s108
      %p110 = scmp.eq.s32.totalorder %s21, 0
      %p111 = por %p109, %p110
      %s112 = ssub.s32 %s15, %s22
      %p113 = scmp.eq.s32.totalorder %s112, 0
      %s115 = sadd.s32 %s114, 1
      %s116 = scalar_select %p113, %s114, %s115
      %p119 = pneg %p113
      %p120 = scmp.eq.s32.totalorder %s15, 1
      %p121 = por %p119, %p120
      %p122 = scmp.ne.s32.totalorder %s114, %s117
      %p123 = scmp.eq.s32.totalorder %s15, 0
      %p124 = por %p122, %p123
      %p125 = scmp.ne.s32.totalorder %s114, %s117
      %p126 = scmp.eq.s32.totalorder %s20, 1
      %p127 = por %p125, %p126
      %p128 = scmp.ne.s32.totalorder %s117, %s118
      %p129 = scmp.eq.s32.totalorder %s20, 0
      %p130 = por %p128, %p129
      %p131 = scmp.ne.s32.totalorder %s117, %s118
      %p132 = scmp.eq.s32.totalorder %s21, 1
      %p133 = por %p131, %p132
      %p135 = scmp.ne.s32.totalorder %s118, %s134
      %p136 = scmp.eq.s32.totalorder %s21, 0
      %p137 = por %p135, %p136
      %s139 = sadd.s32 %s138, 1
      %p142 = scmp.eq.s32.totalorder %s15, 1
      %p143 = scmp.ne.s32.totalorder %s138, %s140
      %p144 = scmp.eq.s32.totalorder %s15, 0
      %p145 = por %p143, %p144
      %p146 = scmp.ne.s32.totalorder %s138, %s140
      %p147 = scmp.eq.s32.totalorder %s20, 1
      %p148 = por %p146, %p147
      %p149 = scmp.ne.s32.totalorder %s140, %s141
      %p150 = scmp.eq.s32.totalorder %s20, 0
      %p151 = por %p149, %p150
      %p152 = scmp.ne.s32.totalorder %s140, %s141
      %p153 = scmp.eq.s32.totalorder %s21, 1
      %p154 = por %p152, %p153
      %p156 = scmp.ne.s32.totalorder %s141, %s155
      %p157 = scmp.eq.s32.totalorder %s21, 0
      %p158 = por %p156, %p157
      %s160 = sadd.s32 %s159, 1
      %p163 = scmp.eq.s32.totalorder %s15, 1
      %p164 = scmp.ne.s32.totalorder %s159, %s161
      %p165 = scmp.eq.s32.totalorder %s15, 0
      %p166 = por %p164, %p165
      %p167 = scmp.ne.s32.totalorder %s159, %s161
      %p168 = scmp.eq.s32.totalorder %s20, 1
      %p169 = por %p167, %p168
      %p170 = scmp.ne.s32.totalorder %s161, %s162
      %p171 = scmp.eq.s32.totalorder %s20, 0
      %p172 = por %p170, %p171
      %p173 = scmp.ne.s32.totalorder %s161, %s162
      %p174 = scmp.eq.s32.totalorder %s21, 1
      %p175 = por %p173, %p174
      %p177 = scmp.ne.s32.totalorder %s162, %s176
      %p178 = scmp.eq.s32.totalorder %s21, 0
      %p179 = por %p177, %p178
      %p180 = scmp.le.s32.totalorder 1, %s15
      %p181 = scmp.lt.s32.totalorder %s15, 3
      %p182 = pnand %p180, %p181
      %p183 = pneg %p182
      // Predicated region
      $region9: #{tpu_custom_call.1} parent=5 // pred_check
        _
      $region10: #{tpu_custom_call.1} parent=5 // pred_check_branch
        %185 = sbr.rel (%p182) target = $region12
      $region11: #{tpu_custom_call.1} parent=5 // pred_region
        %s186 = ssub.s32 %s15, 1
        // Predicated region
        $region13: #{tpu_custom_call.1} parent=11 // pred_check
          %p187 = pneg %p62
        $region14: #{tpu_custom_call.1} parent=11 // pred_check_branch
          %189 = sbr.rel (%p187) target = $region16
        $region15: #{tpu_custom_call.1} parent=11 // pred_region
          _
        $region16: #{tpu_custom_call.1} parent=11 // pred_fallthru
          _
        // Predicated region
        $region17: #{tpu_custom_call.1} parent=11 // pred_check
          %p190 = pneg %p83
        $region18: #{tpu_custom_call.1} parent=11 // pred_check_branch
          %192 = sbr.rel (%p190) target = $region20
        $region19: #{tpu_custom_call.1} parent=11 // pred_region
          _
        $region20: #{tpu_custom_call.1} parent=11 // pred_fallthru
          _
        // Predicated region
        $region21: #{tpu_custom_call.1} parent=11 // pred_check
          %p193 = pneg %p104
        $region22: #{tpu_custom_call.1} parent=11 // pred_check_branch
          %195 = sbr.rel (%p193) target = $region24
        $region23: #{tpu_custom_call.1} parent=11 // pred_region
          _
        $region24: #{tpu_custom_call.1} parent=11 // pred_fallthru
          _
      $region12: #{tpu_custom_call.1} parent=5 // pred_fallthru
        _
      %p196 = scmp.lt.s32.totalorder %s15, 2
      // Predicated region
      $region25: #{tpu_custom_call.1} parent=5 // pred_check
        %p197 = pneg %p196
      $region26: #{tpu_custom_call.1} parent=5 // pred_check_branch
        %199 = sbr.rel (%p197) target = $region28
      $region27: #{tpu_custom_call.1} parent=5 // pred_region
        // Predicated region
        $region29: #{tpu_custom_call.1} parent=27 // pred_check
          %p200 = pneg %p35
        $region30: #{tpu_custom_call.1} parent=27 // pred_check_branch
          %202 = sbr.rel (%p200) target = $region32
        $region31: #{tpu_custom_call.1} parent=27 // pred_region
          %p203 = scmp.lt.s32.totalorder %s15, 1
          %s204 = scalar_select %p203, %s15, 1
          %s205 = smul.addr %s204, 40
          %s206 = smul.addr %s205, 8
          %s207 = scalar_lea.vmem %s0, %s206
        $region32: #{tpu_custom_call.1} parent=27 // pred_fallthru
          _
      $region28: #{tpu_custom_call.1} parent=5 // pred_fallthru
        _
      %p208 = scmp.le.s32.totalorder 1, %s15
      %p209 = scmp.lt.s32.totalorder %s15, 3
      %p210 = pnand %p208, %p209
      %p211 = pneg %p210
      // Predicated region
      $region33: #{tpu_custom_call.1} parent=5 // pred_check
        _
      $region34: #{tpu_custom_call.1} parent=5 // pred_check_branch
        %213 = sbr.rel (%p210) target = $region36
      $region35: #{tpu_custom_call.1} parent=5 // pred_region
        %s214 = ssub.s32 %s15, 1
        %p215 = scmp.lt.s32.totalorder %s20, 1
        %s216 = scalar_select %p215, %s20, 1
        %s217 = smul.addr %s216, 40
        %s218 = smul.addr %s217, 8
        %s219 = scalar_lea.vmem %s0, %s218
        %p220 = pneg %p41
        %p221 = pneg %p38
        %p222 = pneg %p62
        %p223 = pneg %p59
        %p224 = pneg %p83
        %p225 = pneg %p80
        %p226 = pneg %p104
        %p227 = pneg %p101
        %p228 = pneg %p130
        %p229 = pneg %p127
        %p230 = scmp.lt.s32.totalorder %s20, 1
        %s231 = scalar_select %p230, %s20, 1
        %s232 = smul.addr %s231, 10
        %s233 = smul.addr %s232, 8
        %s234 = scalar_lea.vmem %s4, %s233
        %p235 = pneg %p151
        %p236 = pneg %p148
        %p237 = pneg %p172
        %p238 = pneg %p169
        %p239 = scmp.lt.s32.totalorder %s20, 1
        %s240 = scalar_select %p239, %s20, 1
        %s241 = smul.addr %s240, 40
        %s242 = smul.addr %s241, 8
        %s243 = scalar_lea.vmem %s0, %s242
        %p244 = scmp.lt.s32.totalorder %s20, 1
        %s245 = scalar_select %p244, %s20, 1
        %s246 = smul.addr %s245, 10
        %s247 = smul.addr %s246, 8
        %s248 = scalar_lea.vmem %s4, %s247
        %v250 = vld [vmem:[%s243] sm:$0xff]
        %v251 = vld [vmem:[%s243 + $0x8] sm:$0xff]
        %v252 = vld [vmem:[%s243 + $0x10] sm:$0xff]
        %v253 = vld [vmem:[%s243 + $0x18] sm:$0xff]
        %v254 = vld [vmem:[%s243 + $0x20] sm:$0xff]
        %v255 = vld [vmem:[%s243 + $0x28] sm:$0xff]
        %v256 = vld [vmem:[%s243 + $0x30] sm:$0xff]
        %v257 = vld [vmem:[%s243 + $0x38] sm:$0xff]
        %v258 = vld [vmem:[%s243 + $0x40] sm:$0xff]
        %v259 = vld [vmem:[%s243 + $0x48] sm:$0xff]
        %s260 = scalar_lea.vmem %s243, 80
        %v261 = vld [vmem:[%s260] sm:$0xff]
        %v262 = vld [vmem:[%s260 + $0x8] sm:$0xff]
        %v263 = vld [vmem:[%s260 + $0x10] sm:$0xff]
        %v264 = vld [vmem:[%s260 + $0x18] sm:$0xff]
        %v265 = vld [vmem:[%s260 + $0x20] sm:$0xff]
        %v266 = vld [vmem:[%s260 + $0x28] sm:$0xff]
        %v267 = vld [vmem:[%s260 + $0x30] sm:$0xff]
        %v268 = vld [vmem:[%s260 + $0x38] sm:$0xff]
        %v269 = vld [vmem:[%s260 + $0x40] sm:$0xff]
        %v270 = vld [vmem:[%s260 + $0x48] sm:$0xff]
        %v271 = vmax.f32 %v250, %v261
        %v272 = vmax.f32 %v251, %v262
        %v273 = vmax.f32 %v252, %v263
        %v274 = vmax.f32 %v253, %v264
        %v275 = vmax.f32 %v254, %v265
        %v276 = vmax.f32 %v255, %v266
        %v277 = vmax.f32 %v256, %v267
        %v278 = vmax.f32 %v257, %v268
        %v279 = vmax.f32 %v258, %v269
        %v280 = vmax.f32 %v259, %v270
        %s281 = scalar_lea.vmem %s243, 160
        %v282 = vld [vmem:[%s281] sm:$0xff]
        %v283 = vld [vmem:[%s281 + $0x8] sm:$0xff]
        %v284 = vld [vmem:[%s281 + $0x10] sm:$0xff]
        %v285 = vld [vmem:[%s281 + $0x18] sm:$0xff]
        %v286 = vld [vmem:[%s281 + $0x20] sm:$0xff]
        %v287 = vld [vmem:[%s281 + $0x28] sm:$0xff]
        %v288 = vld [vmem:[%s281 + $0x30] sm:$0xff]
        %v289 = vld [vmem:[%s281 + $0x38] sm:$0xff]
        %v290 = vld [vmem:[%s281 + $0x40] sm:$0xff]
        %v291 = vld [vmem:[%s281 + $0x48] sm:$0xff]
        %s292 = scalar_lea.vmem %s243, 240
        %v293 = vld [vmem:[%s292] sm:$0xff]
        %v294 = vld [vmem:[%s292 + $0x8] sm:$0xff]
        %v295 = vld [vmem:[%s292 + $0x10] sm:$0xff]
        %v296 = vld [vmem:[%s292 + $0x18] sm:$0xff]
        %v297 = vld [vmem:[%s292 + $0x20] sm:$0xff]
        %v298 = vld [vmem:[%s292 + $0x28] sm:$0xff]
        %v299 = vld [vmem:[%s292 + $0x30] sm:$0xff]
        %v300 = vld [vmem:[%s292 + $0x38] sm:$0xff]
        %v301 = vld [vmem:[%s292 + $0x40] sm:$0xff]
        %v302 = vld [vmem:[%s292 + $0x48] sm:$0xff]
        %v303 = vmax.f32 %v282, %v293
        %v304 = vmax.f32 %v283, %v294
        %v305 = vmax.f32 %v284, %v295
        %v306 = vmax.f32 %v285, %v296
        %v307 = vmax.f32 %v286, %v297
        %v308 = vmax.f32 %v287, %v298
        %v309 = vmax.f32 %v288, %v299
        %v310 = vmax.f32 %v289, %v300
        %v311 = vmax.f32 %v290, %v301
        %v312 = vmax.f32 %v291, %v302
        %v313 = vmax.f32 %v271, %v303
        %v314 = vmax.f32 %v272, %v304
        %v315 = vmax.f32 %v273, %v305
        %v316 = vmax.f32 %v274, %v306
        %v317 = vmax.f32 %v275, %v307
        %v318 = vmax.f32 %v276, %v308
        %v319 = vmax.f32 %v277, %v309
        %v320 = vmax.f32 %v278, %v310
        %v321 = vmax.f32 %v279, %v311
        %v322 = vmax.f32 %v280, %v312
        %p323 = scmp.eq.s32.totalorder %s20, 0
        // Predicated region
        $region37: #{tpu_custom_call.1} parent=35 // pred_check
          %p324 = pneg %p323
        $region38: #{tpu_custom_call.1} parent=35 // pred_check_branch
          %326 = sbr.rel (%p324) target = $region40
        $region39: #{tpu_custom_call.1} parent=35 // pred_region
          %vm327 = vcmask 31744
          %328 = vst.msk [vmem:[#allocation2] sm:$0xff] %vm327, 0.0
          %vm329 = vcmask 26624
          %330 = vst.msk [vmem:[#allocation2 + $0x8] sm:$0x7] %vm329, 0.0
          %331 = vst.msk [vmem:[#allocation2 + $0x5b] sm:$0xff] %vm327, 0.0
          %332 = vst.msk [vmem:[#allocation2 + $0x63] sm:$0x7] %vm329, 0.0
          %vm333 = vcmask 64512
          %334 = vst.msk [vmem:[#allocation4] sm:$0xff] %vm333, 0.0
          %vm335 = vcmask 59392
          %336 = vst.msk [vmem:[#allocation4 + $0x8] sm:$0x7] %vm335, 0.0
          %337 = vst.msk [vmem:[#allocation4 + $0x5b] sm:$0xff] %vm333, 0.0
          %338 = vst.msk [vmem:[#allocation4 + $0x63] sm:$0x7] %vm335, 0.0
        $region40: #{tpu_custom_call.1} parent=35 // pred_fallthru
          _
        %v339 = vld [vmem:[%s3] sm:$0xff]
        %v340 = vld [vmem:[%s3 + $0x8] sm:$0xff]
        %v341 = vld [vmem:[%s3 + $0x10] sm:$0xff]
        %v342 = vld [vmem:[%s3 + $0x18] sm:$0xff]
        %v343 = vld [vmem:[%s3 + $0x20] sm:$0xff]
        %v344 = vld [vmem:[%s3 + $0x28] sm:$0xff]
        %v345 = vld [vmem:[%s3 + $0x30] sm:$0xff]
        %v346 = vld [vmem:[%s3 + $0x38] sm:$0xff]
        %v347 = vld [vmem:[%s3 + $0x40] sm:$0xff]
        %v348 = vld [vmem:[%s3 + $0x48] sm:$0xff]
        %vm349 = vcmask 31744
        %350 = vst.msk [vmem:[#allocation2 + $0xb] sm:$0xff] %vm349, %v313
        %351 = vst.msk [vmem:[#allocation2 + $0x13] sm:$0xff] %vm349, %v314
        %352 = vst.msk [vmem:[#allocation2 + $0x1b] sm:$0xff] %vm349, %v315
        %353 = vst.msk [vmem:[#allocation2 + $0x23] sm:$0xff] %vm349, %v316
        %354 = vst.msk [vmem:[#allocation2 + $0x2b] sm:$0xff] %vm349, %v317
        %355 = vst.msk [vmem:[#allocation2 + $0x33] sm:$0xff] %vm349, %v318
        %356 = vst.msk [vmem:[#allocation2 + $0x3b] sm:$0xff] %vm349, %v319
        %357 = vst.msk [vmem:[#allocation2 + $0x43] sm:$0xff] %vm349, %v320
        %358 = vst.msk [vmem:[#allocation2 + $0x4b] sm:$0xff] %vm349, %v321
        %359 = vst.msk [vmem:[#allocation2 + $0x53] sm:$0xff] %vm349, %v322
        %v360 = vld [vmem:[#allocation2] sm:$0xff]
        %v361 = vld [vmem:[#allocation2 + $0x8] sm:$0xff]
        %v362 = vld [vmem:[#allocation2 + $0x10] sm:$0xff]
        %v363 = vld [vmem:[#allocation2 + $0x18] sm:$0xff]
        %v364 = vld [vmem:[#allocation2 + $0x20] sm:$0xff]
        %v365 = vld [vmem:[#allocation2 + $0x28] sm:$0xff]
        %v366 = vld [vmem:[#allocation2 + $0x30] sm:$0xff]
        %v367 = vld [vmem:[#allocation2 + $0x38] sm:$0xff]
        %v368 = vld [vmem:[#allocation2 + $0x40] sm:$0xff]
        %v369 = vld [vmem:[#allocation2 + $0x48] sm:$0xff]
        %v370 = vpack.c.bf16 %v361, %v360
        %v371 = vpack.c.bf16 %v363, %v362
        %v372 = vpack.c.bf16 %v365, %v364
        %v373 = vpack.c.bf16 %v367, %v366
        %v374 = vpack.c.bf16 %v369, %v368
        %v380 = vunpack.c.l.b16 %v370
        %v381 = vunpack.c.h.b16 %v370
        %v382 = vunpack.c.l.b16 %v371
        %v383 = vunpack.c.h.b16 %v371
        %v384 = vunpack.c.l.b16 %v372
        %v385 = vunpack.c.h.b16 %v372
        %v386 = vunpack.c.l.b16 %v373
        %v387 = vunpack.c.h.b16 %v373
        %v388 = vunpack.c.l.b16 %v374
        %v389 = vunpack.c.h.b16 %v374
        %v390 = vpack.c.b16 %v380, %v380
        %v391 = vpack.c.b16 %v381, %v381
        %v392 = vpack.c.b16 %v382, %v382
        %v393 = vpack.c.b16 %v383, %v383
        %v394 = vpack.c.b16 %v384, %v384
        %v395 = vpack.c.b16 %v385, %v385
        %v396 = vpack.c.b16 %v386, %v386
        %v397 = vpack.c.b16 %v387, %v387
        %v398 = vpack.c.b16 %v388, %v388
        %v399 = vpack.c.b16 %v389, %v389
        %vm410 = vcmask 27648
        %411 = vst.msk [vmem:[#allocation3] sm:$0xf] %vm410, %v390
        %412 = vst.msk [vmem:[#allocation3 + $0x4] sm:$0xf] %vm410, %v391
        %413 = vst.msk [vmem:[#allocation3 + $0x8] sm:$0xf] %vm410, %v392
        %414 = vst.msk [vmem:[#allocation3 + $0xc] sm:$0xf] %vm410, %v393
        %415 = vst.msk [vmem:[#allocation3 + $0x10] sm:$0xf] %vm410, %v394
        %416 = vst.msk [vmem:[#allocation3 + $0x14] sm:$0xf] %vm410, %v395
        %417 = vst.msk [vmem:[#allocation3 + $0x18] sm:$0xf] %vm410, %v396
        %418 = vst.msk [vmem:[#allocation3 + $0x1c] sm:$0xf] %vm410, %v397
        %419 = vst.msk [vmem:[#allocation3 + $0x20] sm:$0xf] %vm410, %v398
        %420 = vst.msk [vmem:[#allocation3 + $0x24] sm:$0xf] %vm410, %v399
        %v421 = vld [vmem:[#allocation2 + $0x1] sm:$0xff]
        %v422 = vld [vmem:[#allocation2 + $0x9] sm:$0xff]
        %v423 = vld [vmem:[#allocation2 + $0x11] sm:$0xff]
        %v424 = vld [vmem:[#allocation2 + $0x19] sm:$0xff]
        %v425 = vld [vmem:[#allocation2 + $0x21] sm:$0xff]
        %v426 = vld [vmem:[#allocation2 + $0x29] sm:$0xff]
        %v427 = vld [vmem:[#allocation2 + $0x31] sm:$0xff]
        %v428 = vld [vmem:[#allocation2 + $0x39] sm:$0xff]
        %v429 = vld [vmem:[#allocation2 + $0x41] sm:$0xff]
        %v430 = vld [vmem:[#allocation2 + $0x49] sm:$0xff]
        %v431 = vpack.c.bf16 %v422, %v421
        %v432 = vpack.c.bf16 %v424, %v423
        %v433 = vpack.c.bf16 %v426, %v425
        %v434 = vpack.c.bf16 %v428, %v427
        %v435 = vpack.c.bf16 %v430, %v429
        %v441 = vunpack.c.l.b16 %v431
        %v442 = vunpack.c.h.b16 %v431
        %v443 = vunpack.c.l.b16 %v432
        %v444 = vunpack.c.h.b16 %v432
        %v445 = vunpack.c.l.b16 %v433
        %v446 = vunpack.c.h.b16 %v433
        %v447 = vunpack.c.l.b16 %v434
        %v448 = vunpack.c.h.b16 %v434
        %v449 = vunpack.c.l.b16 %v435
        %v450 = vunpack.c.h.b16 %v435
        %v451 = vpack.c.b16 %v441, %v441
        %v452 = vpack.c.b16 %v442, %v442
        %v453 = vpack.c.b16 %v443, %v443
        %v454 = vpack.c.b16 %v444, %v444
        %v455 = vpack.c.b16 %v445, %v445
        %v456 = vpack.c.b16 %v446, %v446
        %v457 = vpack.c.b16 %v447, %v447
        %v458 = vpack.c.b16 %v448, %v448
        %v459 = vpack.c.b16 %v449, %v449
        %v460 = vpack.c.b16 %v450, %v450
        %461 = vrot.lane.b32.xlu0 %v451, 4
        %v462 = vpop.permute.xlu0 %461
        %463 = vrot.lane.b32.xlu0 %v452, 4
        %v464 = vpop.permute.xlu0 %463
        %465 = vrot.lane.b32.xlu0 %v453, 4
        %v466 = vpop.permute.xlu0 %465
        %467 = vrot.lane.b32.xlu0 %v454, 4
        %v468 = vpop.permute.xlu0 %467
        %469 = vrot.lane.b32.xlu0 %v455, 4
        %v470 = vpop.permute.xlu0 %469
        %471 = vrot.lane.b32.xlu0 %v456, 4
        %v472 = vpop.permute.xlu0 %471
        %473 = vrot.lane.b32.xlu0 %v457, 4
        %v474 = vpop.permute.xlu0 %473
        %475 = vrot.lane.b32.xlu0 %v458, 4
        %v476 = vpop.permute.xlu0 %475
        %477 = vrot.lane.b32.xlu0 %v459, 4
        %v478 = vpop.permute.xlu0 %477
        %479 = vrot.lane.b32.xlu0 %v460, 4
        %v480 = vpop.permute.xlu0 %479
        %vm491 = vcmask 60448
        %492 = vst.msk [vmem:[#allocation3] sm:$0xf] %vm491, %v462
        %493 = vst.msk [vmem:[#allocation3 + $0x4] sm:$0xf] %vm491, %v464
        %494 = vst.msk [vmem:[#allocation3 + $0x8] sm:$0xf] %vm491, %v466
        %495 = vst.msk [vmem:[#allocation3 + $0xc] sm:$0xf] %vm491, %v468
        %496 = vst.msk [vmem:[#allocation3 + $0x10] sm:$0xf] %vm491, %v470
        %497 = vst.msk [vmem:[#allocation3 + $0x14] sm:$0xf] %vm491, %v472
        %498 = vst.msk [vmem:[#allocation3 + $0x18] sm:$0xf] %vm491, %v474
        %499 = vst.msk [vmem:[#allocation3 + $0x1c] sm:$0xf] %vm491, %v476
        %500 = vst.msk [vmem:[#allocation3 + $0x20] sm:$0xf] %vm491, %v478
        %501 = vst.msk [vmem:[#allocation3 + $0x24] sm:$0xf] %vm491, %v480
        %v502 = vld [vmem:[#allocation2 + $0x2] sm:$0xff]
        %v503 = vld [vmem:[#allocation2 + $0xa] sm:$0xff]
        %v504 = vld [vmem:[#allocation2 + $0x12] sm:$0xff]
        %v505 = vld [vmem:[#allocation2 + $0x1a] sm:$0xff]
        %v506 = vld [vmem:[#allocation2 + $0x22] sm:$0xff]
        %v507 = vld [vmem:[#allocation2 + $0x2a] sm:$0xff]
        %v508 = vld [vmem:[#allocation2 + $0x32] sm:$0xff]
        %v509 = vld [vmem:[#allocation2 + $0x3a] sm:$0xff]
        %v510 = vld [vmem:[#allocation2 + $0x42] sm:$0xff]
        %v511 = vld [vmem:[#allocation2 + $0x4a] sm:$0xff]
        %v512 = vpack.c.bf16 %v503, %v502
        %v513 = vpack.c.bf16 %v505, %v504
        %v514 = vpack.c.bf16 %v507, %v506
        %v515 = vpack.c.bf16 %v509, %v508
        %v516 = vpack.c.bf16 %v511, %v510
        %v522 = vunpack.c.l.b16 %v512
        %v523 = vunpack.c.h.b16 %v512
        %v524 = vunpack.c.l.b16 %v513
        %v525 = vunpack.c.h.b16 %v513
        %v526 = vunpack.c.l.b16 %v514
        %v527 = vunpack.c.h.b16 %v514
        %v528 = vunpack.c.l.b16 %v515
        %v529 = vunpack.c.h.b16 %v515
        %v530 = vunpack.c.l.b16 %v516
        %v531 = vunpack.c.h.b16 %v516
        %v532 = vpack.c.b16 %v522, %v522
        %v533 = vpack.c.b16 %v523, %v523
        %v534 = vpack.c.b16 %v524, %v524
        %v535 = vpack.c.b16 %v525, %v525
        %v536 = vpack.c.b16 %v526, %v526
        %v537 = vpack.c.b16 %v527, %v527
        %v538 = vpack.c.b16 %v528, %v528
        %v539 = vpack.c.b16 %v529, %v529
        %v540 = vpack.c.b16 %v530, %v530
        %v541 = vpack.c.b16 %v531, %v531
        %542 = vrot.lane.b32.xlu0 %v532, 8
        %v543 = vpop.permute.xlu0 %542
        %544 = vrot.lane.b32.xlu0 %v533, 8
        %v545 = vpop.permute.xlu0 %544
        %546 = vrot.lane.b32.xlu0 %v534, 8
        %v547 = vpop.permute.xlu0 %546
        %548 = vrot.lane.b32.xlu0 %v535, 8
        %v549 = vpop.permute.xlu0 %548
        %550 = vrot.lane.b32.xlu0 %v536, 8
        %v551 = vpop.permute.xlu0 %550
        %552 = vrot.lane.b32.xlu0 %v537, 8
        %v553 = vpop.permute.xlu0 %552
        %554 = vrot.lane.b32.xlu0 %v538, 8
        %v555 = vpop.permute.xlu0 %554
        %556 = vrot.lane.b32.xlu0 %v539, 8
        %v557 = vpop.permute.xlu0 %556
        %558 = vrot.lane.b32.xlu0 %v540, 8
        %v559 = vpop.permute.xlu0 %558
        %560 = vrot.lane.b32.xlu0 %v541, 8
        %v561 = vpop.permute.xlu0 %560
        %vm572 = vcmask 93248
        %573 = vst.msk [vmem:[#allocation3] sm:$0xf] %vm572, %v543
        %574 = vst.msk [vmem:[#allocation3 + $0x4] sm:$0xf] %vm572, %v545
        %575 = vst.msk [vmem:[#allocation3 + $0x8] sm:$0xf] %vm572, %v547
        %576 = vst.msk [vmem:[#allocation3 + $0xc] sm:$0xf] %vm572, %v549
        %577 = vst.msk [vmem:[#allocation3 + $0x10] sm:$0xf] %vm572, %v551
        %578 = vst.msk [vmem:[#allocation3 + $0x14] sm:$0xf] %vm572, %v553
        %579 = vst.msk [vmem:[#allocation3 + $0x18] sm:$0xf] %vm572, %v555
        %580 = vst.msk [vmem:[#allocation3 + $0x1c] sm:$0xf] %vm572, %v557
        %581 = vst.msk [vmem:[#allocation3 + $0x20] sm:$0xf] %vm572, %v559
        %582 = vst.msk [vmem:[#allocation3 + $0x24] sm:$0xf] %vm572, %v561
        %v583 = vld [vmem:[#allocation2 + $0xa] sm:$0xff]
        %v584 = vld [vmem:[#allocation2 + $0x12] sm:$0xff]
        %v585 = vld [vmem:[#allocation2 + $0x1a] sm:$0xff]
        %v586 = vld [vmem:[#allocation2 + $0x22] sm:$0xff]
        %v587 = vld [vmem:[#allocation2 + $0x2a] sm:$0xff]
        %v588 = vld [vmem:[#allocation2 + $0x32] sm:$0xff]
        %v589 = vld [vmem:[#allocation2 + $0x3a] sm:$0xff]
        %v590 = vld [vmem:[#allocation2 + $0x42] sm:$0xff]
        %v591 = vld [vmem:[#allocation2 + $0x4a] sm:$0xff]
        %v592 = vld [vmem:[#allocation2 + $0x52] sm:$0xff]
        %v593 = vpack.c.bf16 %v584, %v583
        %v594 = vpack.c.bf16 %v586, %v585
        %v595 = vpack.c.bf16 %v588, %v587
        %v596 = vpack.c.bf16 %v590, %v589
        %v597 = vpack.c.bf16 %v592, %v591
        %v603 = vunpack.c.l.b16 %v593
        %v604 = vunpack.c.h.b16 %v593
        %v605 = vunpack.c.l.b16 %v594
        %v606 = vunpack.c.h.b16 %v594
        %v607 = vunpack.c.l.b16 %v595
        %v608 = vunpack.c.h.b16 %v595
        %v609 = vunpack.c.l.b16 %v596
        %v610 = vunpack.c.h.b16 %v596
        %v611 = vunpack.c.l.b16 %v597
        %v612 = vunpack.c.h.b16 %v597
        %v613 = vpack.c.b16 %v603, %v603
        %v614 = vpack.c.b16 %v604, %v604
        %v615 = vpack.c.b16 %v605, %v605
        %v616 = vpack.c.b16 %v606, %v606
        %v617 = vpack.c.b16 %v607, %v607
        %v618 = vpack.c.b16 %v608, %v608
        %v619 = vpack.c.b16 %v609, %v609
        %v620 = vpack.c.b16 %v610, %v610
        %v621 = vpack.c.b16 %v611, %v611
        %v622 = vpack.c.b16 %v612, %v612
        %623 = vrot.lane.b32.xlu0 %v613, 12
        %v624 = vpop.permute.xlu0 %623
        %625 = vrot.lane.b32.xlu0 %v614, 12
        %v626 = vpop.permute.xlu0 %625
        %627 = vrot.lane.b32.xlu0 %v615, 12
        %v628 = vpop.permute.xlu0 %627
        %629 = vrot.lane.b32.xlu0 %v616, 12
        %v630 = vpop.permute.xlu0 %629
        %631 = vrot.lane.b32.xlu0 %v617, 12
        %v632 = vpop.permute.xlu0 %631
        %633 = vrot.lane.b32.xlu0 %v618, 12
        %v634 = vpop.permute.xlu0 %633
        %635 = vrot.lane.b32.xlu0 %v619, 12
        %v636 = vpop.permute.xlu0 %635
        %637 = vrot.lane.b32.xlu0 %v620, 12
        %v638 = vpop.permute.xlu0 %637
        %639 = vrot.lane.b32.xlu0 %v621, 12
        %v640 = vpop.permute.xlu0 %639
        %641 = vrot.lane.b32.xlu0 %v622, 12
        %v642 = vpop.permute.xlu0 %641
        %vm653 = vcmask 126048
        %654 = vst.msk [vmem:[#allocation3] sm:$0xf] %vm653, %v624
        %655 = vst.msk [vmem:[#allocation3 + $0x4] sm:$0xf] %vm653, %v626
        %656 = vst.msk [vmem:[#allocation3 + $0x8] sm:$0xf] %vm653, %v628
        %657 = vst.msk [vmem:[#allocation3 + $0xc] sm:$0xf] %vm653, %v630
        %658 = vst.msk [vmem:[#allocation3 + $0x10] sm:$0xf] %vm653, %v632
        %659 = vst.msk [vmem:[#allocation3 + $0x14] sm:$0xf] %vm653, %v634
        %660 = vst.msk [vmem:[#allocation3 + $0x18] sm:$0xf] %vm653, %v636
        %661 = vst.msk [vmem:[#allocation3 + $0x1c] sm:$0xf] %vm653, %v638
        %662 = vst.msk [vmem:[#allocation3 + $0x20] sm:$0xf] %vm653, %v640
        %663 = vst.msk [vmem:[#allocation3 + $0x24] sm:$0xf] %vm653, %v642
        %v664 = vld [vmem:[#allocation2 + $0xb] sm:$0xff]
        %v665 = vld [vmem:[#allocation2 + $0x13] sm:$0xff]
        %v666 = vld [vmem:[#allocation2 + $0x1b] sm:$0xff]
        %v667 = vld [vmem:[#allocation2 + $0x23] sm:$0xff]
        %v668 = vld [vmem:[#allocation2 + $0x2b] sm:$0xff]
        %v669 = vld [vmem:[#allocation2 + $0x33] sm:$0xff]
        %v670 = vld [vmem:[#allocation2 + $0x3b] sm:$0xff]
        %v671 = vld [vmem:[#allocation2 + $0x43] sm:$0xff]
        %v672 = vld [vmem:[#allocation2 + $0x4b] sm:$0xff]
        %v673 = vld [vmem:[#allocation2 + $0x53] sm:$0xff]
        %v674 = vpack.c.bf16 %v665, %v664
        %v675 = vpack.c.bf16 %v667, %v666
        %v676 = vpack.c.bf16 %v669, %v668
        %v677 = vpack.c.bf16 %v671, %v670
        %v678 = vpack.c.bf16 %v673, %v672
        %v684 = vunpack.c.l.b16 %v674
        %v685 = vunpack.c.h.b16 %v674
        %v686 = vunpack.c.l.b16 %v675
        %v687 = vunpack.c.h.b16 %v675
        %v688 = vunpack.c.l.b16 %v676
        %v689 = vunpack.c.h.b16 %v676
        %v690 = vunpack.c.l.b16 %v677
        %v691 = vunpack.c.h.b16 %v677
        %v692 = vunpack.c.l.b16 %v678
        %v693 = vunpack.c.h.b16 %v678
        %v694 = vpack.c.b16 %v684, %v684
        %v695 = vpack.c.b16 %v685, %v685
        %v696 = vpack.c.b16 %v686, %v686
        %v697 = vpack.c.b16 %v687, %v687
        %v698 = vpack.c.b16 %v688, %v688
        %v699 = vpack.c.b16 %v689, %v689
        %v700 = vpack.c.b16 %v690, %v690
        %v701 = vpack.c.b16 %v691, %v691
        %v702 = vpack.c.b16 %v692, %v692
        %v703 = vpack.c.b16 %v693, %v693
        %704 = vrot.lane.b32.xlu0 %v694, 16
        %v705 = vpop.permute.xlu0 %704
        %706 = vrot.lane.b32.xlu0 %v695, 16
        %v707 = vpop.permute.xlu0 %706
        %708 = vrot.lane.b32.xlu0 %v696, 16
        %v709 = vpop.permute.xlu0 %708
        %710 = vrot.lane.b32.xlu0 %v697, 16
        %v711 = vpop.permute.xlu0 %710
        %712 = vrot.lane.b32.xlu0 %v698, 16
        %v713 = vpop.permute.xlu0 %712
        %714 = vrot.lane.b32.xlu0 %v699, 16
        %v715 = vpop.permute.xlu0 %714
        %716 = vrot.lane.b32.xlu0 %v700, 16
        %v717 = vpop.permute.xlu0 %716
        %718 = vrot.lane.b32.xlu0 %v701, 16
        %v719 = vpop.permute.xlu0 %718
        %720 = vrot.lane.b32.xlu0 %v702, 16
        %v721 = vpop.permute.xlu0 %720
        %722 = vrot.lane.b32.xlu0 %v703, 16
        %v723 = vpop.permute.xlu0 %722
        %vm734 = vcmask 158848
        %735 = vst.msk [vmem:[#allocation3] sm:$0xf] %vm734, %v705
        %736 = vst.msk [vmem:[#allocation3 + $0x4] sm:$0xf] %vm734, %v707
        %737 = vst.msk [vmem:[#allocation3 + $0x8] sm:$0xf] %vm734, %v709
        %738 = vst.msk [vmem:[#allocation3 + $0xc] sm:$0xf] %vm734, %v711
        %739 = vst.msk [vmem:[#allocation3 + $0x10] sm:$0xf] %vm734, %v713
        %740 = vst.msk [vmem:[#allocation3 + $0x14] sm:$0xf] %vm734, %v715
        %741 = vst.msk [vmem:[#allocation3 + $0x18] sm:$0xf] %vm734, %v717
        %742 = vst.msk [vmem:[#allocation3 + $0x1c] sm:$0xf] %vm734, %v719
        %743 = vst.msk [vmem:[#allocation3 + $0x20] sm:$0xf] %vm734, %v721
        %744 = vst.msk [vmem:[#allocation3 + $0x24] sm:$0xf] %vm734, %v723
        %v745 = vld [vmem:[#allocation2 + $0xc] sm:$0xff]
        %v746 = vld [vmem:[#allocation2 + $0x14] sm:$0xff]
        %v747 = vld [vmem:[#allocation2 + $0x1c] sm:$0xff]
        %v748 = vld [vmem:[#allocation2 + $0x24] sm:$0xff]
        %v749 = vld [vmem:[#allocation2 + $0x2c] sm:$0xff]
        %v750 = vld [vmem:[#allocation2 + $0x34] sm:$0xff]
        %v751 = vld [vmem:[#allocation2 + $0x3c] sm:$0xff]
        %v752 = vld [vmem:[#allocation2 + $0x44] sm:$0xff]
        %v753 = vld [vmem:[#allocation2 + $0x4c] sm:$0xff]
        %v754 = vld [vmem:[#allocation2 + $0x54] sm:$0xff]
        %v755 = vpack.c.bf16 %v746, %v745
        %v756 = vpack.c.bf16 %v748, %v747
        %v757 = vpack.c.bf16 %v750, %v749
        %v758 = vpack.c.bf16 %v752, %v751
        %v759 = vpack.c.bf16 %v754, %v753
        %v765 = vunpack.c.l.b16 %v755
        %v766 = vunpack.c.h.b16 %v755
        %v767 = vunpack.c.l.b16 %v756
        %v768 = vunpack.c.h.b16 %v756
        %v769 = vunpack.c.l.b16 %v757
        %v770 = vunpack.c.h.b16 %v757
        %v771 = vunpack.c.l.b16 %v758
        %v772 = vunpack.c.h.b16 %v758
        %v773 = vunpack.c.l.b16 %v759
        %v774 = vunpack.c.h.b16 %v759
        %v775 = vpack.c.b16 %v765, %v765
        %v776 = vpack.c.b16 %v766, %v766
        %v777 = vpack.c.b16 %v767, %v767
        %v778 = vpack.c.b16 %v768, %v768
        %v779 = vpack.c.b16 %v769, %v769
        %v780 = vpack.c.b16 %v770, %v770
        %v781 = vpack.c.b16 %v771, %v771
        %v782 = vpack.c.b16 %v772, %v772
        %v783 = vpack.c.b16 %v773, %v773
        %v784 = vpack.c.b16 %v774, %v774
        %785 = vrot.lane.b32.xlu0 %v775, 20
        %v786 = vpop.permute.xlu0 %785
        %787 = vrot.lane.b32.xlu0 %v776, 20
        %v788 = vpop.permute.xlu0 %787
        %789 = vrot.lane.b32.xlu0 %v777, 20
        %v790 = vpop.permute.xlu0 %789
        %791 = vrot.lane.b32.xlu0 %v778, 20
        %v792 = vpop.permute.xlu0 %791
        %793 = vrot.lane.b32.xlu0 %v779, 20
        %v794 = vpop.permute.xlu0 %793
        %795 = vrot.lane.b32.xlu0 %v780, 20
        %v796 = vpop.permute.xlu0 %795
        %797 = vrot.lane.b32.xlu0 %v781, 20
        %v798 = vpop.permute.xlu0 %797
        %799 = vrot.lane.b32.xlu0 %v782, 20
        %v800 = vpop.permute.xlu0 %799
        %801 = vrot.lane.b32.xlu0 %v783, 20
        %v802 = vpop.permute.xlu0 %801
        %803 = vrot.lane.b32.xlu0 %v784, 20
        %v804 = vpop.permute.xlu0 %803
        %vm815 = vcmask 191648
        %816 = vst.msk [vmem:[#allocation3] sm:$0xf] %vm815, %v786
        %817 = vst.msk [vmem:[#allocation3 + $0x4] sm:$0xf] %vm815, %v788
        %818 = vst.msk [vmem:[#allocation3 + $0x8] sm:$0xf] %vm815, %v790
        %819 = vst.msk [vmem:[#allocation3 + $0xc] sm:$0xf] %vm815, %v792
        %820 = vst.msk [vmem:[#allocation3 + $0x10] sm:$0xf] %vm815, %v794
        %821 = vst.msk [vmem:[#allocation3 + $0x14] sm:$0xf] %vm815, %v796
        %822 = vst.msk [vmem:[#allocation3 + $0x18] sm:$0xf] %vm815, %v798
        %823 = vst.msk [vmem:[#allocation3 + $0x1c] sm:$0xf] %vm815, %v800
        %824 = vst.msk [vmem:[#allocation3 + $0x20] sm:$0xf] %vm815, %v802
        %825 = vst.msk [vmem:[#allocation3 + $0x24] sm:$0xf] %vm815, %v804
        %v826 = vld [vmem:[#allocation2 + $0x14] sm:$0xff]
        %v827 = vld [vmem:[#allocation2 + $0x1c] sm:$0xff]
        %v828 = vld [vmem:[#allocation2 + $0x24] sm:$0xff]
        %v829 = vld [vmem:[#allocation2 + $0x2c] sm:$0xff]
        %v830 = vld [vmem:[#allocation2 + $0x34] sm:$0xff]
        %v831 = vld [vmem:[#allocation2 + $0x3c] sm:$0xff]
        %v832 = vld [vmem:[#allocation2 + $0x44] sm:$0xff]
        %v833 = vld [vmem:[#allocation2 + $0x4c] sm:$0xff]
        %v834 = vld [vmem:[#allocation2 + $0x54] sm:$0xff]
        %v835 = vld [vmem:[#allocation2 + $0x5c] sm:$0xff]
        %v836 = vpack.c.bf16 %v827, %v826
        %v837 = vpack.c.bf16 %v829, %v828
        %v838 = vpack.c.bf16 %v831, %v830
        %v839 = vpack.c.bf16 %v833, %v832
        %v840 = vpack.c.bf16 %v835, %v834
        %v846 = vunpack.c.l.b16 %v836
        %v847 = vunpack.c.h.b16 %v836
        %v848 = vunpack.c.l.b16 %v837
        %v849 = vunpack.c.h.b16 %v837
        %v850 = vunpack.c.l.b16 %v838
        %v851 = vunpack.c.h.b16 %v838
        %v852 = vunpack.c.l.b16 %v839
        %v853 = vunpack.c.h.b16 %v839
        %v854 = vunpack.c.l.b16 %v840
        %v855 = vunpack.c.h.b16 %v840
        %v856 = vpack.c.b16 %v846, %v846
        %v857 = vpack.c.b16 %v847, %v847
        %v858 = vpack.c.b16 %v848, %v848
        %v859 = vpack.c.b16 %v849, %v849
        %v860 = vpack.c.b16 %v850, %v850
        %v861 = vpack.c.b16 %v851, %v851
        %v862 = vpack.c.b16 %v852, %v852
        %v863 = vpack.c.b16 %v853, %v853
        %v864 = vpack.c.b16 %v854, %v854
        %v865 = vpack.c.b16 %v855, %v855
        %866 = vrot.lane.b32.xlu0 %v856, 24
        %v867 = vpop.permute.xlu0 %866
        %868 = vrot.lane.b32.xlu0 %v857, 24
        %v869 = vpop.permute.xlu0 %868
        %870 = vrot.lane.b32.xlu0 %v858, 24
        %v871 = vpop.permute.xlu0 %870
        %872 = vrot.lane.b32.xlu0 %v859, 24
        %v873 = vpop.permute.xlu0 %872
        %874 = vrot.lane.b32.xlu0 %v860, 24
        %v875 = vpop.permute.xlu0 %874
        %876 = vrot.lane.b32.xlu0 %v861, 24
        %v877 = vpop.permute.xlu0 %876
        %878 = vrot.lane.b32.xlu0 %v862, 24
        %v879 = vpop.permute.xlu0 %878
        %880 = vrot.lane.b32.xlu0 %v863, 24
        %v881 = vpop.permute.xlu0 %880
        %882 = vrot.lane.b32.xlu0 %v864, 24
        %v883 = vpop.permute.xlu0 %882
        %884 = vrot.lane.b32.xlu0 %v865, 24
        %v885 = vpop.permute.xlu0 %884
        %vm896 = vcmask 224448
        %897 = vst.msk [vmem:[#allocation3] sm:$0xf] %vm896, %v867
        %898 = vst.msk [vmem:[#allocation3 + $0x4] sm:$0xf] %vm896, %v869
        %899 = vst.msk [vmem:[#allocation3 + $0x8] sm:$0xf] %vm896, %v871
        %900 = vst.msk [vmem:[#allocation3 + $0xc] sm:$0xf] %vm896, %v873
        %901 = vst.msk [vmem:[#allocation3 + $0x10] sm:$0xf] %vm896, %v875
        %902 = vst.msk [vmem:[#allocation3 + $0x14] sm:$0xf] %vm896, %v877
        %903 = vst.msk [vmem:[#allocation3 + $0x18] sm:$0xf] %vm896, %v879
        %904 = vst.msk [vmem:[#allocation3 + $0x1c] sm:$0xf] %vm896, %v881
        %905 = vst.msk [vmem:[#allocation3 + $0x20] sm:$0xf] %vm896, %v883
        %906 = vst.msk [vmem:[#allocation3 + $0x24] sm:$0xf] %vm896, %v885
        %v907 = vld [vmem:[#allocation2 + $0x15] sm:$0xff]
        %v908 = vld [vmem:[#allocation2 + $0x1d] sm:$0xff]
        %v909 = vld [vmem:[#allocation2 + $0x25] sm:$0xff]
        %v910 = vld [vmem:[#allocation2 + $0x2d] sm:$0xff]
        %v911 = vld [vmem:[#allocation2 + $0x35] sm:$0xff]
        %v912 = vld [vmem:[#allocation2 + $0x3d] sm:$0xff]
        %v913 = vld [vmem:[#allocation2 + $0x45] sm:$0xff]
        %v914 = vld [vmem:[#allocation2 + $0x4d] sm:$0xff]
        %v915 = vld [vmem:[#allocation2 + $0x55] sm:$0xff]
        %v916 = vld [vmem:[#allocation2 + $0x5d] sm:$0xff]
        %v917 = vpack.c.bf16 %v908, %v907
        %v918 = vpack.c.bf16 %v910, %v909
        %v919 = vpack.c.bf16 %v912, %v911
        %v920 = vpack.c.bf16 %v914, %v913
        %v921 = vpack.c.bf16 %v916, %v915
        %v927 = vunpack.c.l.b16 %v917
        %v928 = vunpack.c.h.b16 %v917
        %v929 = vunpack.c.l.b16 %v918
        %v930 = vunpack.c.h.b16 %v918
        %v931 = vunpack.c.l.b16 %v919
        %v932 = vunpack.c.h.b16 %v919
        %v933 = vunpack.c.l.b16 %v920
        %v934 = vunpack.c.h.b16 %v920
        %v935 = vunpack.c.l.b16 %v921
        %v936 = vunpack.c.h.b16 %v921
        %v937 = vpack.c.b16 %v927, %v927
        %v938 = vpack.c.b16 %v928, %v928
        %v939 = vpack.c.b16 %v929, %v929
        %v940 = vpack.c.b16 %v930, %v930
        %v941 = vpack.c.b16 %v931, %v931
        %v942 = vpack.c.b16 %v932, %v932
        %v943 = vpack.c.b16 %v933, %v933
        %v944 = vpack.c.b16 %v934, %v934
        %v945 = vpack.c.b16 %v935, %v935
        %v946 = vpack.c.b16 %v936, %v936
        %947 = vrot.lane.b32.xlu0 %v937, 28
        %v948 = vpop.permute.xlu0 %947
        %949 = vrot.lane.b32.xlu0 %v938, 28
        %v950 = vpop.permute.xlu0 %949
        %951 = vrot.lane.b32.xlu0 %v939, 28
        %v952 = vpop.permute.xlu0 %951
        %953 = vrot.lane.b32.xlu0 %v940, 28
        %v954 = vpop.permute.xlu0 %953
        %955 = vrot.lane.b32.xlu0 %v941, 28
        %v956 = vpop.permute.xlu0 %955
        %957 = vrot.lane.b32.xlu0 %v942, 28
        %v958 = vpop.permute.xlu0 %957
        %959 = vrot.lane.b32.xlu0 %v943, 28
        %v960 = vpop.permute.xlu0 %959
        %961 = vrot.lane.b32.xlu0 %v944, 28
        %v962 = vpop.permute.xlu0 %961
        %963 = vrot.lane.b32.xlu0 %v945, 28
        %v964 = vpop.permute.xlu0 %963
        %965 = vrot.lane.b32.xlu0 %v946, 28
        %v966 = vpop.permute.xlu0 %965
        %vm977 = vcmask 257248
        %978 = vst.msk [vmem:[#allocation3] sm:$0xf] %vm977, %v948
        %979 = vst.msk [vmem:[#allocation3 + $0x4] sm:$0xf] %vm977, %v950
        %980 = vst.msk [vmem:[#allocation3 + $0x8] sm:$0xf] %vm977, %v952
        %981 = vst.msk [vmem:[#allocation3 + $0xc] sm:$0xf] %vm977, %v954
        %982 = vst.msk [vmem:[#allocation3 + $0x10] sm:$0xf] %vm977, %v956
        %983 = vst.msk [vmem:[#allocation3 + $0x14] sm:$0xf] %vm977, %v958
        %984 = vst.msk [vmem:[#allocation3 + $0x18] sm:$0xf] %vm977, %v960
        %985 = vst.msk [vmem:[#allocation3 + $0x1c] sm:$0xf] %vm977, %v962
        %986 = vst.msk [vmem:[#allocation3 + $0x20] sm:$0xf] %vm977, %v964
        %987 = vst.msk [vmem:[#allocation3 + $0x24] sm:$0xf] %vm977, %v966
        %v988 = vld [vmem:[#allocation2 + $0x16] sm:$0xff]
        %v989 = vld [vmem:[#allocation2 + $0x1e] sm:$0xff]
        %v990 = vld [vmem:[#allocation2 + $0x26] sm:$0xff]
        %v991 = vld [vmem:[#allocation2 + $0x2e] sm:$0xff]
        %v992 = vld [vmem:[#allocation2 + $0x36] sm:$0xff]
        %v993 = vld [vmem:[#allocation2 + $0x3e] sm:$0xff]
        %v994 = vld [vmem:[#allocation2 + $0x46] sm:$0xff]
        %v995 = vld [vmem:[#allocation2 + $0x4e] sm:$0xff]
        %v996 = vld [vmem:[#allocation2 + $0x56] sm:$0xff]
        %v997 = vld [vmem:[#allocation2 + $0x5e] sm:$0xff]
        %v998 = vpack.c.bf16 %v989, %v988
        %v999 = vpack.c.bf16 %v991, %v990
        %v1000 = vpack.c.bf16 %v993, %v992
        %v1001 = vpack.c.bf16 %v995, %v994
        %v1002 = vpack.c.bf16 %v997, %v996
        %v1008 = vunpack.c.l.b16 %v998
        %v1009 = vunpack.c.h.b16 %v998
        %v1010 = vunpack.c.l.b16 %v999
        %v1011 = vunpack.c.h.b16 %v999
        %v1012 = vunpack.c.l.b16 %v1000
        %v1013 = vunpack.c.h.b16 %v1000
        %v1014 = vunpack.c.l.b16 %v1001
        %v1015 = vunpack.c.h.b16 %v1001
        %v1016 = vunpack.c.l.b16 %v1002
        %v1017 = vunpack.c.h.b16 %v1002
        %v1018 = vpack.c.b16 %v1008, %v1008
        %v1019 = vpack.c.b16 %v1009, %v1009
        %v1020 = vpack.c.b16 %v1010, %v1010
        %v1021 = vpack.c.b16 %v1011, %v1011
        %v1022 = vpack.c.b16 %v1012, %v1012
        %v1023 = vpack.c.b16 %v1013, %v1013
        %v1024 = vpack.c.b16 %v1014, %v1014
        %v1025 = vpack.c.b16 %v1015, %v1015
        %v1026 = vpack.c.b16 %v1016, %v1016
        %v1027 = vpack.c.b16 %v1017, %v1017
        %1028 = vrot.lane.b32.xlu0 %v1018, 32
        %v1029 = vpop.permute.xlu0 %1028
        %1030 = vrot.lane.b32.xlu0 %v1019, 32
        %v1031 = vpop.permute.xlu0 %1030
        %1032 = vrot.lane.b32.xlu0 %v1020, 32
        %v1033 = vpop.permute.xlu0 %1032
        %1034 = vrot.lane.b32.xlu0 %v1021, 32
        %v1035 = vpop.permute.xlu0 %1034
        %1036 = vrot.lane.b32.xlu0 %v1022, 32
        %v1037 = vpop.permute.xlu0 %1036
        %1038 = vrot.lane.b32.xlu0 %v1023, 32
        %v1039 = vpop.permute.xlu0 %1038
        %1040 = vrot.lane.b32.xlu0 %v1024, 32
        %v1041 = vpop.permute.xlu0 %1040
        %1042 = vrot.lane.b32.xlu0 %v1025, 32
        %v1043 = vpop.permute.xlu0 %1042
        %1044 = vrot.lane.b32.xlu0 %v1026, 32
        %v1045 = vpop.permute.xlu0 %1044
        %1046 = vrot.lane.b32.xlu0 %v1027, 32
        %v1047 = vpop.permute.xlu0 %1046
        %vm1058 = vcmask 290048
        %1059 = vst.msk [vmem:[#allocation3] sm:$0xf] %vm1058, %v1029
        %1060 = vst.msk [vmem:[#allocation3 + $0x4] sm:$0xf] %vm1058, %v1031
        %1061 = vst.msk [vmem:[#allocation3 + $0x8] sm:$0xf] %vm1058, %v1033
        %1062 = vst.msk [vmem:[#allocation3 + $0xc] sm:$0xf] %vm1058, %v1035
        %1063 = vst.msk [vmem:[#allocation3 + $0x10] sm:$0xf] %vm1058, %v1037
        %1064 = vst.msk [vmem:[#allocation3 + $0x14] sm:$0xf] %vm1058, %v1039
        %1065 = vst.msk [vmem:[#allocation3 + $0x18] sm:$0xf] %vm1058, %v1041
        %1066 = vst.msk [vmem:[#allocation3 + $0x1c] sm:$0xf] %vm1058, %v1043
        %1067 = vst.msk [vmem:[#allocation3 + $0x20] sm:$0xf] %vm1058, %v1045
        %1068 = vst.msk [vmem:[#allocation3 + $0x24] sm:$0xf] %vm1058, %v1047
        %v1069 = vld [vmem:[#allocation3] sm:$0xf]
        %v1070 = vld [vmem:[#allocation3 + $0x4] sm:$0xf]
        %v1071 = vld [vmem:[#allocation3 + $0x8] sm:$0xf]
        %v1072 = vld [vmem:[#allocation3 + $0xc] sm:$0xf]
        %v1073 = vld [vmem:[#allocation3 + $0x10] sm:$0xf]
        %v1074 = vld [vmem:[#allocation3 + $0x14] sm:$0xf]
        %v1075 = vld [vmem:[#allocation3 + $0x18] sm:$0xf]
        %v1076 = vld [vmem:[#allocation3 + $0x1c] sm:$0xf]
        %v1077 = vld [vmem:[#allocation3 + $0x20] sm:$0xf]
        %v1078 = vld [vmem:[#allocation3 + $0x24] sm:$0xf]
        %v1079 = vld [vmem:[%s1] sm:$0xf]
        %v1080 = vld [vmem:[%s1 + $0x4] sm:$0xf]
        %v1081 = vld [vmem:[%s1 + $0x8] sm:$0xf]
        %v1082 = vld [vmem:[%s1 + $0xc] sm:$0xf]
        %v1083 = vld [vmem:[%s1 + $0x10] sm:$0x3]
        %v1094 = vunpack.c.l.b16 %v1069
        %v1095 = vunpack.c.l.b16 %v1070
        %v1096 = vunpack.c.l.b16 %v1071
        %v1097 = vunpack.c.l.b16 %v1072
        %v1098 = vunpack.c.l.b16 %v1073
        %v1099 = vunpack.c.l.b16 %v1074
        %v1100 = vunpack.c.l.b16 %v1075
        %v1101 = vunpack.c.l.b16 %v1076
        %v1102 = vunpack.c.l.b16 %v1077
        %v1103 = vunpack.c.l.b16 %v1078
        %v1104 = vpack.c.b16 %v1095, %v1094
        %v1105 = vpack.c.b16 %v1097, %v1096
        %v1106 = vpack.c.b16 %v1099, %v1098
        %v1107 = vpack.c.b16 %v1101, %v1100
        %v1108 = vpack.c.b16 %v1103, %v1102
        %v1114 = vunpack.c.l.b16 %v1079
        %v1115 = vunpack.c.l.b16 %v1080
        %v1116 = vunpack.c.l.b16 %v1081
        %v1117 = vunpack.c.l.b16 %v1082
        %v1118 = vunpack.c.l.b16 %v1083
        %v1119 = vpack.c.b16 %v1115, %v1114
        %v1120 = vpack.c.b16 %v1117, %v1116
        %v1121 = vpack.c.b16 %v1118, %v1118
        %vm1124 = vcmask 293888
        %v1126 = vsel %vm1124, %v1104, 0
        %v1129 = vsel %vm1124, %v1105, 0
        %v1132 = vsel %vm1124, %v1106, 0
        %v1135 = vsel %vm1124, %v1107, 0
        %v1138 = vsel %vm1124, %v1108, 0
        %vm1140 = vcmask 1041408
        %v1142 = vsel %vm1140, %v1121, 0
        %1144 = vmatprep.subr.bf16.mxu0 0
        %1145 = vmatpush1.bf16.msra.mxu0 0
        %1146 = vmatprep.subr.bf16.mxu0 0
        %1147 = vmatpush1.bf16.msra.mxu0 0
        %1148 = vmatprep.subr.bf16.mxu0 0
        %1149 = vmatpush1.bf16.msra.mxu0 0
        %1150 = vmatprep.subr.bf16.mxu0 0
        %1151 = vmatpush1.bf16.msra.mxu0 0
        %1152 = vmatprep.subr.bf16.mxu0 0
        %1153 = vmatpush1.bf16.msra.mxu0 0
        %1154 = vmatprep.subr.bf16.mxu0 0
        %1155 = vmatpush1.bf16.msra.mxu0 %v1142
        %1156 = vmatprep.subr.bf16.mxu0 0
        %1157 = vmatpush1.bf16.msra.mxu0 %v1120
        %1158 = vmatprep.subr.bf16.mxu0 0
        %1159 = vmatpush1.bf16.msra.mxu0 %v1119
        %1160 = vmatprep.subr.bf16.mxu0 0
        %1161 = vmatpush2.bf16.msra.mxu0 0
        %1162 = vmatprep.subr.bf16.mxu0 0
        %1163 = vmatpush2.bf16.msra.mxu0 0
        %1164 = vmatprep.subr.bf16.mxu0 0
        %1165 = vmatpush2.bf16.msra.mxu0 0
        %1166 = vmatprep.subr.bf16.mxu0 0
        %1167 = vmatpush2.bf16.msra.mxu0 0
        %1168 = vmatprep.subr.bf16.mxu0 0
        %1169 = vmatpush2.bf16.msra.mxu0 0
        %1170 = vmatprep.subr.bf16.mxu0 0
        %1171 = vmatpush2.bf16.msra.mxu0 0
        %1172 = vmatprep.subr.bf16.mxu0 0
        %1173 = vmatpush2.bf16.msra.mxu0 0
        %1174 = vmatprep.subr.bf16.mxu0 0
        %1175 = vmatpush2.bf16.msra.mxu0 0
        %1176 = vmatprep.mubr.bf16.mxu0 0
        %1177 = vmatmul.mubr.bf16.gmra.mxu0 %v1126
        %v1178 = vpop.f32.mrf.mxu0
        %v1179 = vadd.f32 0.0, %v1178
        %v1180 = vpop.f32.mrf.mxu0
        %v1181 = vpop.f32.mrf.mxu0
        %v1182 = vadd.f32 0.0, %v1181
        %v1183 = vpop.f32.mrf.mxu0
        %1184 = vmatprep.mubr.bf16.mxu0 0
        %1185 = vmatmul.mubr.bf16.gmra.mxu0 %v1129
        %v1186 = vpop.f32.mrf.mxu0
        %v1187 = vadd.f32 0.0, %v1186
        %v1188 = vpop.f32.mrf.mxu0
        %v1189 = vpop.f32.mrf.mxu0
        %v1190 = vadd.f32 0.0, %v1189
        %v1191 = vpop.f32.mrf.mxu0
        %1192 = vmatprep.mubr.bf16.mxu0 0
        %1193 = vmatmul.mubr.bf16.gmra.mxu0 %v1132
        %v1194 = vpop.f32.mrf.mxu0
        %v1195 = vadd.f32 0.0, %v1194
        %v1196 = vpop.f32.mrf.mxu0
        %v1197 = vpop.f32.mrf.mxu0
        %v1198 = vadd.f32 0.0, %v1197
        %v1199 = vpop.f32.mrf.mxu0
        %1200 = vmatprep.mubr.bf16.mxu0 0
        %1201 = vmatmul.mubr.bf16.gmra.mxu0 %v1135
        %v1202 = vpop.f32.mrf.mxu0
        %v1203 = vadd.f32 0.0, %v1202
        %v1204 = vpop.f32.mrf.mxu0
        %v1205 = vpop.f32.mrf.mxu0
        %v1206 = vadd.f32 0.0, %v1205
        %v1207 = vpop.f32.mrf.mxu0
        %1208 = vmatprep.mubr.bf16.mxu0 0
        %1209 = vmatmul.mubr.bf16.gmra.mxu0 %v1138
        %v1210 = vpop.f32.mrf.mxu0
        %v1211 = vadd.f32 0.0, %v1210
        %v1212 = vpop.f32.mrf.mxu0
        %v1213 = vpop.f32.mrf.mxu0
        %v1214 = vadd.f32 0.0, %v1213
        %v1215 = vpop.f32.mrf.mxu0
        %1216 = vdwg.mxu0
        %v1217 = vmax.f32 %v1179, 0.0
        %v1218 = vmax.f32 %v1182, 0.0
        %v1219 = vmax.f32 %v1187, 0.0
        %v1220 = vmax.f32 %v1190, 0.0
        %v1221 = vmax.f32 %v1195, 0.0
        %v1222 = vmax.f32 %v1198, 0.0
        %v1223 = vmax.f32 %v1203, 0.0
        %v1224 = vmax.f32 %v1206, 0.0
        %v1225 = vmax.f32 %v1211, 0.0
        %v1226 = vmax.f32 %v1214, 0.0
        %1228 = vset.pattern.permute.xlu0 0
        %1229 = vperm.xlu0 %1228, %v339
        %v1230 = vpop.permute.xlu0 %1229
        %1233 = vset.pattern.permute.xlu0 0
        %1234 = vperm.xlu0 %1233, %v340
        %v1235 = vpop.permute.xlu0 %1234
        %1238 = vset.pattern.permute.xlu0 0
        %1239 = vperm.xlu0 %1238, %v341
        %v1240 = vpop.permute.xlu0 %1239
        %1243 = vset.pattern.permute.xlu0 0
        %1244 = vperm.xlu0 %1243, %v342
        %v1245 = vpop.permute.xlu0 %1244
        %1248 = vset.pattern.permute.xlu0 0
        %1249 = vperm.xlu0 %1248, %v343
        %v1250 = vpop.permute.xlu0 %1249
        %1253 = vset.pattern.permute.xlu0 0
        %1254 = vperm.xlu0 %1253, %v344
        %v1255 = vpop.permute.xlu0 %1254
        %1258 = vset.pattern.permute.xlu0 0
        %1259 = vperm.xlu0 %1258, %v345
        %v1260 = vpop.permute.xlu0 %1259
        %1263 = vset.pattern.permute.xlu0 0
        %1264 = vperm.xlu0 %1263, %v346
        %v1265 = vpop.permute.xlu0 %1264
        %1268 = vset.pattern.permute.xlu0 0
        %1269 = vperm.xlu0 %1268, %v347
        %v1270 = vpop.permute.xlu0 %1269
        %1273 = vset.pattern.permute.xlu0 0
        %1274 = vperm.xlu0 %1273, %v348
        %v1275 = vpop.permute.xlu0 %1274
        %v1277 = vmul.f32 %v1217, %v1230
        %v1278 = vmul.f32 %v1218, %v1235
        %v1279 = vmul.f32 %v1219, %v1240
        %v1280 = vmul.f32 %v1220, %v1245
        %v1281 = vmul.f32 %v1221, %v1250
        %v1282 = vmul.f32 %v1222, %v1255
        %v1283 = vmul.f32 %v1223, %v1260
        %v1284 = vmul.f32 %v1224, %v1265
        %v1285 = vmul.f32 %v1225, %v1270
        %v1286 = vmul.f32 %v1226, %v1275
        %vm1287 = vcmask 64512
        %1288 = vst.msk [vmem:[#allocation4 + $0xb] sm:$0xff] %vm1287, %v1277
        %1289 = vst.msk [vmem:[#allocation4 + $0x13] sm:$0xff] %vm1287, %v1278
        %1290 = vst.msk [vmem:[#allocation4 + $0x1b] sm:$0xff] %vm1287, %v1279
        %1291 = vst.msk [vmem:[#allocation4 + $0x23] sm:$0xff] %vm1287, %v1280
        %1292 = vst.msk [vmem:[#allocation4 + $0x2b] sm:$0xff] %vm1287, %v1281
        %1293 = vst.msk [vmem:[#allocation4 + $0x33] sm:$0xff] %vm1287, %v1282
        %1294 = vst.msk [vmem:[#allocation4 + $0x3b] sm:$0xff] %vm1287, %v1283
        %1295 = vst.msk [vmem:[#allocation4 + $0x43] sm:$0xff] %vm1287, %v1284
        %1296 = vst.msk [vmem:[#allocation4 + $0x4b] sm:$0xff] %vm1287, %v1285
        %1297 = vst.msk [vmem:[#allocation4 + $0x53] sm:$0xff] %vm1287, %v1286
        %v1298 = vld [vmem:[#allocation4] sm:$0xff]
        %v1299 = vld [vmem:[#allocation4 + $0x8] sm:$0xff]
        %v1300 = vld [vmem:[#allocation4 + $0x10] sm:$0xff]
        %v1301 = vld [vmem:[#allocation4 + $0x18] sm:$0xff]
        %v1302 = vld [vmem:[#allocation4 + $0x20] sm:$0xff]
        %v1303 = vld [vmem:[#allocation4 + $0x28] sm:$0xff]
        %v1304 = vld [vmem:[#allocation4 + $0x30] sm:$0xff]
        %v1305 = vld [vmem:[#allocation4 + $0x38] sm:$0xff]
        %v1306 = vld [vmem:[#allocation4 + $0x40] sm:$0xff]
        %v1307 = vld [vmem:[#allocation4 + $0x48] sm:$0xff]
        %v1308 = vpack.c.bf16 %v1299, %v1298
        %v1309 = vpack.c.bf16 %v1301, %v1300
        %v1310 = vpack.c.bf16 %v1303, %v1302
        %v1311 = vpack.c.bf16 %v1305, %v1304
        %v1312 = vpack.c.bf16 %v1307, %v1306
        %v1318 = vunpack.c.l.b16 %v1308
        %v1319 = vunpack.c.h.b16 %v1308
        %v1320 = vunpack.c.l.b16 %v1309
        %v1321 = vunpack.c.h.b16 %v1309
        %v1322 = vunpack.c.l.b16 %v1310
        %v1323 = vunpack.c.h.b16 %v1310
        %v1324 = vunpack.c.l.b16 %v1311
        %v1325 = vunpack.c.h.b16 %v1311
        %v1326 = vunpack.c.l.b16 %v1312
        %v1327 = vunpack.c.h.b16 %v1312
        %v1328 = vpack.c.b16 %v1318, %v1318
        %v1329 = vpack.c.b16 %v1319, %v1319
        %v1330 = vpack.c.b16 %v1320, %v1320
        %v1331 = vpack.c.b16 %v1321, %v1321
        %v1332 = vpack.c.b16 %v1322, %v1322
        %v1333 = vpack.c.b16 %v1323, %v1323
        %v1334 = vpack.c.b16 %v1324, %v1324
        %v1335 = vpack.c.b16 %v1325, %v1325
        %v1336 = vpack.c.b16 %v1326, %v1326
        %v1337 = vpack.c.b16 %v1327, %v1327
        %vm1348 = vcmask 60416
        %1349 = vst.msk [vmem:[#allocation5] sm:$0xf] %vm1348, %v1328
        %1350 = vst.msk [vmem:[#allocation5 + $0x4] sm:$0xf] %vm1348, %v1329
        %1351 = vst.msk [vmem:[#allocation5 + $0x8] sm:$0xf] %vm1348, %v1330
        %1352 = vst.msk [vmem:[#allocation5 + $0xc] sm:$0xf] %vm1348, %v1331
        %1353 = vst.msk [vmem:[#allocation5 + $0x10] sm:$0xf] %vm1348, %v1332
        %1354 = vst.msk [vmem:[#allocation5 + $0x14] sm:$0xf] %vm1348, %v1333
        %1355 = vst.msk [vmem:[#allocation5 + $0x18] sm:$0xf] %vm1348, %v1334
        %1356 = vst.msk [vmem:[#allocation5 + $0x1c] sm:$0xf] %vm1348, %v1335
        %1357 = vst.msk [vmem:[#allocation5 + $0x20] sm:$0xf] %vm1348, %v1336
        %1358 = vst.msk [vmem:[#allocation5 + $0x24] sm:$0xf] %vm1348, %v1337
        %v1359 = vld [vmem:[#allocation4 + $0x1] sm:$0xff]
        %v1360 = vld [vmem:[#allocation4 + $0x9] sm:$0xff]
        %v1361 = vld [vmem:[#allocation4 + $0x11] sm:$0xff]
        %v1362 = vld [vmem:[#allocation4 + $0x19] sm:$0xff]
        %v1363 = vld [vmem:[#allocation4 + $0x21] sm:$0xff]
        %v1364 = vld [vmem:[#allocation4 + $0x29] sm:$0xff]
        %v1365 = vld [vmem:[#allocation4 + $0x31] sm:$0xff]
        %v1366 = vld [vmem:[#allocation4 + $0x39] sm:$0xff]
        %v1367 = vld [vmem:[#allocation4 + $0x41] sm:$0xff]
        %v1368 = vld [vmem:[#allocation4 + $0x49] sm:$0xff]
        %v1369 = vpack.c.bf16 %v1360, %v1359
        %v1370 = vpack.c.bf16 %v1362, %v1361
        %v1371 = vpack.c.bf16 %v1364, %v1363
        %v1372 = vpack.c.bf16 %v1366, %v1365
        %v1373 = vpack.c.bf16 %v1368, %v1367
        %v1379 = vunpack.c.l.b16 %v1369
        %v1380 = vunpack.c.h.b16 %v1369
        %v1381 = vunpack.c.l.b16 %v1370
        %v1382 = vunpack.c.h.b16 %v1370
        %v1383 = vunpack.c.l.b16 %v1371
        %v1384 = vunpack.c.h.b16 %v1371
        %v1385 = vunpack.c.l.b16 %v1372
        %v1386 = vunpack.c.h.b16 %v1372
        %v1387 = vunpack.c.l.b16 %v1373
        %v1388 = vunpack.c.h.b16 %v1373
        %v1389 = vpack.c.b16 %v1379, %v1379
        %v1390 = vpack.c.b16 %v1380, %v1380
        %v1391 = vpack.c.b16 %v1381, %v1381
        %v1392 = vpack.c.b16 %v1382, %v1382
        %v1393 = vpack.c.b16 %v1383, %v1383
        %v1394 = vpack.c.b16 %v1384, %v1384
        %v1395 = vpack.c.b16 %v1385, %v1385
        %v1396 = vpack.c.b16 %v1386, %v1386
        %v1397 = vpack.c.b16 %v1387, %v1387
        %v1398 = vpack.c.b16 %v1388, %v1388
        %1399 = vrot.lane.b32.xlu0 %v1389, 8
        %v1400 = vpop.permute.xlu0 %1399
        %1401 = vrot.lane.b32.xlu0 %v1390, 8
        %v1402 = vpop.permute.xlu0 %1401
        %1403 = vrot.lane.b32.xlu0 %v1391, 8
        %v1404 = vpop.permute.xlu0 %1403
        %1405 = vrot.lane.b32.xlu0 %v1392, 8
        %v1406 = vpop.permute.xlu0 %1405
        %1407 = vrot.lane.b32.xlu0 %v1393, 8
        %v1408 = vpop.permute.xlu0 %1407
        %1409 = vrot.lane.b32.xlu0 %v1394, 8
        %v1410 = vpop.permute.xlu0 %1409
        %1411 = vrot.lane.b32.xlu0 %v1395, 8
        %v1412 = vpop.permute.xlu0 %1411
        %1413 = vrot.lane.b32.xlu0 %v1396, 8
        %v1414 = vpop.permute.xlu0 %1413
        %1415 = vrot.lane.b32.xlu0 %v1397, 8
        %v1416 = vpop.permute.xlu0 %1415
        %1417 = vrot.lane.b32.xlu0 %v1398, 8
        %v1418 = vpop.permute.xlu0 %1417
        %vm1429 = vcmask 126016
        %1430 = vst.msk [vmem:[#allocation5] sm:$0xf] %vm1429, %v1400
        %1431 = vst.msk [vmem:[#allocation5 + $0x4] sm:$0xf] %vm1429, %v1402
        %1432 = vst.msk [vmem:[#allocation5 + $0x8] sm:$0xf] %vm1429, %v1404
        %1433 = vst.msk [vmem:[#allocation5 + $0xc] sm:$0xf] %vm1429, %v1406
        %1434 = vst.msk [vmem:[#allocation5 + $0x10] sm:$0xf] %vm1429, %v1408
        %1435 = vst.msk [vmem:[#allocation5 + $0x14] sm:$0xf] %vm1429, %v1410
        %1436 = vst.msk [vmem:[#allocation5 + $0x18] sm:$0xf] %vm1429, %v1412
        %1437 = vst.msk [vmem:[#allocation5 + $0x1c] sm:$0xf] %vm1429, %v1414
        %1438 = vst.msk [vmem:[#allocation5 + $0x20] sm:$0xf] %vm1429, %v1416
        %1439 = vst.msk [vmem:[#allocation5 + $0x24] sm:$0xf] %vm1429, %v1418
        %v1440 = vld [vmem:[#allocation4 + $0x2] sm:$0xff]
        %v1441 = vld [vmem:[#allocation4 + $0xa] sm:$0xff]
        %v1442 = vld [vmem:[#allocation4 + $0x12] sm:$0xff]
        %v1443 = vld [vmem:[#allocation4 + $0x1a] sm:$0xff]
        %v1444 = vld [vmem:[#allocation4 + $0x22] sm:$0xff]
        %v1445 = vld [vmem:[#allocation4 + $0x2a] sm:$0xff]
        %v1446 = vld [vmem:[#allocation4 + $0x32] sm:$0xff]
        %v1447 = vld [vmem:[#allocation4 + $0x3a] sm:$0xff]
        %v1448 = vld [vmem:[#allocation4 + $0x42] sm:$0xff]
        %v1449 = vld [vmem:[#allocation4 + $0x4a] sm:$0xff]
        %v1450 = vpack.c.bf16 %v1441, %v1440
        %v1451 = vpack.c.bf16 %v1443, %v1442
        %v1452 = vpack.c.bf16 %v1445, %v1444
        %v1453 = vpack.c.bf16 %v1447, %v1446
        %v1454 = vpack.c.bf16 %v1449, %v1448
        %v1460 = vunpack.c.l.b16 %v1450
        %v1461 = vunpack.c.h.b16 %v1450
        %v1462 = vunpack.c.l.b16 %v1451
        %v1463 = vunpack.c.h.b16 %v1451
        %v1464 = vunpack.c.l.b16 %v1452
        %v1465 = vunpack.c.h.b16 %v1452
        %v1466 = vunpack.c.l.b16 %v1453
        %v1467 = vunpack.c.h.b16 %v1453
        %v1468 = vunpack.c.l.b16 %v1454
        %v1469 = vunpack.c.h.b16 %v1454
        %v1470 = vpack.c.b16 %v1460, %v1460
        %v1471 = vpack.c.b16 %v1461, %v1461
        %v1472 = vpack.c.b16 %v1462, %v1462
        %v1473 = vpack.c.b16 %v1463, %v1463
        %v1474 = vpack.c.b16 %v1464, %v1464
        %v1475 = vpack.c.b16 %v1465, %v1465
        %v1476 = vpack.c.b16 %v1466, %v1466
        %v1477 = vpack.c.b16 %v1467, %v1467
        %v1478 = vpack.c.b16 %v1468, %v1468
        %v1479 = vpack.c.b16 %v1469, %v1469
        %1480 = vrot.lane.b32.xlu0 %v1470, 16
        %v1481 = vpop.permute.xlu0 %1480
        %1482 = vrot.lane.b32.xlu0 %v1471, 16
        %v1483 = vpop.permute.xlu0 %1482
        %1484 = vrot.lane.b32.xlu0 %v1472, 16
        %v1485 = vpop.permute.xlu0 %1484
        %1486 = vrot.lane.b32.xlu0 %v1473, 16
        %v1487 = vpop.permute.xlu0 %1486
        %1488 = vrot.lane.b32.xlu0 %v1474, 16
        %v1489 = vpop.permute.xlu0 %1488
        %1490 = vrot.lane.b32.xlu0 %v1475, 16
        %v1491 = vpop.permute.xlu0 %1490
        %1492 = vrot.lane.b32.xlu0 %v1476, 16
        %v1493 = vpop.permute.xlu0 %1492
        %1494 = vrot.lane.b32.xlu0 %v1477, 16
        %v1495 = vpop.permute.xlu0 %1494
        %1496 = vrot.lane.b32.xlu0 %v1478, 16
        %v1497 = vpop.permute.xlu0 %1496
        %1498 = vrot.lane.b32.xlu0 %v1479, 16
        %v1499 = vpop.permute.xlu0 %1498
        %vm1510 = vcmask 191616
        %1511 = vst.msk [vmem:[#allocation5] sm:$0xf] %vm1510, %v1481
        %1512 = vst.msk [vmem:[#allocation5 + $0x4] sm:$0xf] %vm1510, %v1483
        %1513 = vst.msk [vmem:[#allocation5 + $0x8] sm:$0xf] %vm1510, %v1485
        %1514 = vst.msk [vmem:[#allocation5 + $0xc] sm:$0xf] %vm1510, %v1487
        %1515 = vst.msk [vmem:[#allocation5 + $0x10] sm:$0xf] %vm1510, %v1489
        %1516 = vst.msk [vmem:[#allocation5 + $0x14] sm:$0xf] %vm1510, %v1491
        %1517 = vst.msk [vmem:[#allocation5 + $0x18] sm:$0xf] %vm1510, %v1493
        %1518 = vst.msk [vmem:[#allocation5 + $0x1c] sm:$0xf] %vm1510, %v1495
        %1519 = vst.msk [vmem:[#allocation5 + $0x20] sm:$0xf] %vm1510, %v1497
        %1520 = vst.msk [vmem:[#allocation5 + $0x24] sm:$0xf] %vm1510, %v1499
        %v1521 = vld [vmem:[#allocation4 + $0xa] sm:$0xff]
        %v1522 = vld [vmem:[#allocation4 + $0x12] sm:$0xff]
        %v1523 = vld [vmem:[#allocation4 + $0x1a] sm:$0xff]
        %v1524 = vld [vmem:[#allocation4 + $0x22] sm:$0xff]
        %v1525 = vld [vmem:[#allocation4 + $0x2a] sm:$0xff]
        %v1526 = vld [vmem:[#allocation4 + $0x32] sm:$0xff]
        %v1527 = vld [vmem:[#allocation4 + $0x3a] sm:$0xff]
        %v1528 = vld [vmem:[#allocation4 + $0x42] sm:$0xff]
        %v1529 = vld [vmem:[#allocation4 + $0x4a] sm:$0xff]
        %v1530 = vld [vmem:[#allocation4 + $0x52] sm:$0xff]
        %v1531 = vpack.c.bf16 %v1522, %v1521
        %v1532 = vpack.c.bf16 %v1524, %v1523
        %v1533 = vpack.c.bf16 %v1526, %v1525
        %v1534 = vpack.c.bf16 %v1528, %v1527
        %v1535 = vpack.c.bf16 %v1530, %v1529
        %v1541 = vunpack.c.l.b16 %v1531
        %v1542 = vunpack.c.h.b16 %v1531
        %v1543 = vunpack.c.l.b16 %v1532
        %v1544 = vunpack.c.h.b16 %v1532
        %v1545 = vunpack.c.l.b16 %v1533
        %v1546 = vunpack.c.h.b16 %v1533
        %v1547 = vunpack.c.l.b16 %v1534
        %v1548 = vunpack.c.h.b16 %v1534
        %v1549 = vunpack.c.l.b16 %v1535
        %v1550 = vunpack.c.h.b16 %v1535
        %v1551 = vpack.c.b16 %v1541, %v1541
        %v1552 = vpack.c.b16 %v1542, %v1542
        %v1553 = vpack.c.b16 %v1543, %v1543
        %v1554 = vpack.c.b16 %v1544, %v1544
        %v1555 = vpack.c.b16 %v1545, %v1545
        %v1556 = vpack.c.b16 %v1546, %v1546
        %v1557 = vpack.c.b16 %v1547, %v1547
        %v1558 = vpack.c.b16 %v1548, %v1548
        %v1559 = vpack.c.b16 %v1549, %v1549
        %v1560 = vpack.c.b16 %v1550, %v1550
        %1561 = vrot.lane.b32.xlu0 %v1551, 24
        %v1562 = vpop.permute.xlu0 %1561
        %1563 = vrot.lane.b32.xlu0 %v1552, 24
        %v1564 = vpop.permute.xlu0 %1563
        %1565 = vrot.lane.b32.xlu0 %v1553, 24
        %v1566 = vpop.permute.xlu0 %1565
        %1567 = vrot.lane.b32.xlu0 %v1554, 24
        %v1568 = vpop.permute.xlu0 %1567
        %1569 = vrot.lane.b32.xlu0 %v1555, 24
        %v1570 = vpop.permute.xlu0 %1569
        %1571 = vrot.lane.b32.xlu0 %v1556, 24
        %v1572 = vpop.permute.xlu0 %1571
        %1573 = vrot.lane.b32.xlu0 %v1557, 24
        %v1574 = vpop.permute.xlu0 %1573
        %1575 = vrot.lane.b32.xlu0 %v1558, 24
        %v1576 = vpop.permute.xlu0 %1575
        %1577 = vrot.lane.b32.xlu0 %v1559, 24
        %v1578 = vpop.permute.xlu0 %1577
        %1579 = vrot.lane.b32.xlu0 %v1560, 24
        %v1580 = vpop.permute.xlu0 %1579
        %vm1591 = vcmask 257216
        %1592 = vst.msk [vmem:[#allocation5] sm:$0xf] %vm1591, %v1562
        %1593 = vst.msk [vmem:[#allocation5 + $0x4] sm:$0xf] %vm1591, %v1564
        %1594 = vst.msk [vmem:[#allocation5 + $0x8] sm:$0xf] %vm1591, %v1566
        %1595 = vst.msk [vmem:[#allocation5 + $0xc] sm:$0xf] %vm1591, %v1568
        %1596 = vst.msk [vmem:[#allocation5 + $0x10] sm:$0xf] %vm1591, %v1570
        %1597 = vst.msk [vmem:[#allocation5 + $0x14] sm:$0xf] %vm1591, %v1572
        %1598 = vst.msk [vmem:[#allocation5 + $0x18] sm:$0xf] %vm1591, %v1574
        %1599 = vst.msk [vmem:[#allocation5 + $0x1c] sm:$0xf] %vm1591, %v1576
        %1600 = vst.msk [vmem:[#allocation5 + $0x20] sm:$0xf] %vm1591, %v1578
        %1601 = vst.msk [vmem:[#allocation5 + $0x24] sm:$0xf] %vm1591, %v1580
        %v1602 = vld [vmem:[#allocation4 + $0xb] sm:$0xff]
        %v1603 = vld [vmem:[#allocation4 + $0x13] sm:$0xff]
        %v1604 = vld [vmem:[#allocation4 + $0x1b] sm:$0xff]
        %v1605 = vld [vmem:[#allocation4 + $0x23] sm:$0xff]
        %v1606 = vld [vmem:[#allocation4 + $0x2b] sm:$0xff]
        %v1607 = vld [vmem:[#allocation4 + $0x33] sm:$0xff]
        %v1608 = vld [vmem:[#allocation4 + $0x3b] sm:$0xff]
        %v1609 = vld [vmem:[#allocation4 + $0x43] sm:$0xff]
        %v1610 = vld [vmem:[#allocation4 + $0x4b] sm:$0xff]
        %v1611 = vld [vmem:[#allocation4 + $0x53] sm:$0xff]
        %v1612 = vpack.c.bf16 %v1603, %v1602
        %v1613 = vpack.c.bf16 %v1605, %v1604
        %v1614 = vpack.c.bf16 %v1607, %v1606
        %v1615 = vpack.c.bf16 %v1609, %v1608
        %v1616 = vpack.c.bf16 %v1611, %v1610
        %v1622 = vunpack.c.l.b16 %v1612
        %v1623 = vunpack.c.h.b16 %v1612
        %v1624 = vunpack.c.l.b16 %v1613
        %v1625 = vunpack.c.h.b16 %v1613
        %v1626 = vunpack.c.l.b16 %v1614
        %v1627 = vunpack.c.h.b16 %v1614
        %v1628 = vunpack.c.l.b16 %v1615
        %v1629 = vunpack.c.h.b16 %v1615
        %v1630 = vunpack.c.l.b16 %v1616
        %v1631 = vunpack.c.h.b16 %v1616
        %v1632 = vpack.c.b16 %v1622, %v1622
        %v1633 = vpack.c.b16 %v1623, %v1623
        %v1634 = vpack.c.b16 %v1624, %v1624
        %v1635 = vpack.c.b16 %v1625, %v1625
        %v1636 = vpack.c.b16 %v1626, %v1626
        %v1637 = vpack.c.b16 %v1627, %v1627
        %v1638 = vpack.c.b16 %v1628, %v1628
        %v1639 = vpack.c.b16 %v1629, %v1629
        %v1640 = vpack.c.b16 %v1630, %v1630
        %v1641 = vpack.c.b16 %v1631, %v1631
        %1642 = vrot.lane.b32.xlu0 %v1632, 32
        %v1643 = vpop.permute.xlu0 %1642
        %1644 = vrot.lane.b32.xlu0 %v1633, 32
        %v1645 = vpop.permute.xlu0 %1644
        %1646 = vrot.lane.b32.xlu0 %v1634, 32
        %v1647 = vpop.permute.xlu0 %1646
        %1648 = vrot.lane.b32.xlu0 %v1635, 32
        %v1649 = vpop.permute.xlu0 %1648
        %1650 = vrot.lane.b32.xlu0 %v1636, 32
        %v1651 = vpop.permute.xlu0 %1650
        %1652 = vrot.lane.b32.xlu0 %v1637, 32
        %v1653 = vpop.permute.xlu0 %1652
        %1654 = vrot.lane.b32.xlu0 %v1638, 32
        %v1655 = vpop.permute.xlu0 %1654
        %1656 = vrot.lane.b32.xlu0 %v1639, 32
        %v1657 = vpop.permute.xlu0 %1656
        %1658 = vrot.lane.b32.xlu0 %v1640, 32
        %v1659 = vpop.permute.xlu0 %1658
        %1660 = vrot.lane.b32.xlu0 %v1641, 32
        %v1661 = vpop.permute.xlu0 %1660
        %vm1672 = vcmask 322816
        %1673 = vst.msk [vmem:[#allocation5] sm:$0xf] %vm1672, %v1643
        %1674 = vst.msk [vmem:[#allocation5 + $0x4] sm:$0xf] %vm1672, %v1645
        %1675 = vst.msk [vmem:[#allocation5 + $0x8] sm:$0xf] %vm1672, %v1647
        %1676 = vst.msk [vmem:[#allocation5 + $0xc] sm:$0xf] %vm1672, %v1649
        %1677 = vst.msk [vmem:[#allocation5 + $0x10] sm:$0xf] %vm1672, %v1651
        %1678 = vst.msk [vmem:[#allocation5 + $0x14] sm:$0xf] %vm1672, %v1653
        %1679 = vst.msk [vmem:[#allocation5 + $0x18] sm:$0xf] %vm1672, %v1655
        %1680 = vst.msk [vmem:[#allocation5 + $0x1c] sm:$0xf] %vm1672, %v1657
        %1681 = vst.msk [vmem:[#allocation5 + $0x20] sm:$0xf] %vm1672, %v1659
        %1682 = vst.msk [vmem:[#allocation5 + $0x24] sm:$0xf] %vm1672, %v1661
        %v1683 = vld [vmem:[#allocation4 + $0xc] sm:$0xff]
        %v1684 = vld [vmem:[#allocation4 + $0x14] sm:$0xff]
        %v1685 = vld [vmem:[#allocation4 + $0x1c] sm:$0xff]
        %v1686 = vld [vmem:[#allocation4 + $0x24] sm:$0xff]
        %v1687 = vld [vmem:[#allocation4 + $0x2c] sm:$0xff]
        %v1688 = vld [vmem:[#allocation4 + $0x34] sm:$0xff]
        %v1689 = vld [vmem:[#allocation4 + $0x3c] sm:$0xff]
        %v1690 = vld [vmem:[#allocation4 + $0x44] sm:$0xff]
        %v1691 = vld [vmem:[#allocation4 + $0x4c] sm:$0xff]
        %v1692 = vld [vmem:[#allocation4 + $0x54] sm:$0xff]
        %v1693 = vpack.c.bf16 %v1684, %v1683
        %v1694 = vpack.c.bf16 %v1686, %v1685
        %v1695 = vpack.c.bf16 %v1688, %v1687
        %v1696 = vpack.c.bf16 %v1690, %v1689
        %v1697 = vpack.c.bf16 %v1692, %v1691
        %v1703 = vunpack.c.l.b16 %v1693
        %v1704 = vunpack.c.h.b16 %v1693
        %v1705 = vunpack.c.l.b16 %v1694
        %v1706 = vunpack.c.h.b16 %v1694
        %v1707 = vunpack.c.l.b16 %v1695
        %v1708 = vunpack.c.h.b16 %v1695
        %v1709 = vunpack.c.l.b16 %v1696
        %v1710 = vunpack.c.h.b16 %v1696
        %v1711 = vunpack.c.l.b16 %v1697
        %v1712 = vunpack.c.h.b16 %v1697
        %v1713 = vpack.c.b16 %v1703, %v1703
        %v1714 = vpack.c.b16 %v1704, %v1704
        %v1715 = vpack.c.b16 %v1705, %v1705
        %v1716 = vpack.c.b16 %v1706, %v1706
        %v1717 = vpack.c.b16 %v1707, %v1707
        %v1718 = vpack.c.b16 %v1708, %v1708
        %v1719 = vpack.c.b16 %v1709, %v1709
        %v1720 = vpack.c.b16 %v1710, %v1710
        %v1721 = vpack.c.b16 %v1711, %v1711
        %v1722 = vpack.c.b16 %v1712, %v1712
        %1723 = vrot.lane.b32.xlu0 %v1713, 40
        %v1724 = vpop.permute.xlu0 %1723
        %1725 = vrot.lane.b32.xlu0 %v1714, 40
        %v1726 = vpop.permute.xlu0 %1725
        %1727 = vrot.lane.b32.xlu0 %v1715, 40
        %v1728 = vpop.permute.xlu0 %1727
        %1729 = vrot.lane.b32.xlu0 %v1716, 40
        %v1730 = vpop.permute.xlu0 %1729
        %1731 = vrot.lane.b32.xlu0 %v1717, 40
        %v1732 = vpop.permute.xlu0 %1731
        %1733 = vrot.lane.b32.xlu0 %v1718, 40
        %v1734 = vpop.permute.xlu0 %1733
        %1735 = vrot.lane.b32.xlu0 %v1719, 40
        %v1736 = vpop.permute.xlu0 %1735
        %1737 = vrot.lane.b32.xlu0 %v1720, 40
        %v1738 = vpop.permute.xlu0 %1737
        %1739 = vrot.lane.b32.xlu0 %v1721, 40
        %v1740 = vpop.permute.xlu0 %1739
        %1741 = vrot.lane.b32.xlu0 %v1722, 40
        %v1742 = vpop.permute.xlu0 %1741
        %vm1753 = vcmask 388416
        %1754 = vst.msk [vmem:[#allocation5] sm:$0xf] %vm1753, %v1724
        %1755 = vst.msk [vmem:[#allocation5 + $0x4] sm:$0xf] %vm1753, %v1726
        %1756 = vst.msk [vmem:[#allocation5 + $0x8] sm:$0xf] %vm1753, %v1728
        %1757 = vst.msk [vmem:[#allocation5 + $0xc] sm:$0xf] %vm1753, %v1730
        %1758 = vst.msk [vmem:[#allocation5 + $0x10] sm:$0xf] %vm1753, %v1732
        %1759 = vst.msk [vmem:[#allocation5 + $0x14] sm:$0xf] %vm1753, %v1734
        %1760 = vst.msk [vmem:[#allocation5 + $0x18] sm:$0xf] %vm1753, %v1736
        %1761 = vst.msk [vmem:[#allocation5 + $0x1c] sm:$0xf] %vm1753, %v1738
        %1762 = vst.msk [vmem:[#allocation5 + $0x20] sm:$0xf] %vm1753, %v1740
        %1763 = vst.msk [vmem:[#allocation5 + $0x24] sm:$0xf] %vm1753, %v1742
        %v1764 = vld [vmem:[#allocation4 + $0x14] sm:$0xff]
        %v1765 = vld [vmem:[#allocation4 + $0x1c] sm:$0xff]
        %v1766 = vld [vmem:[#allocation4 + $0x24] sm:$0xff]
        %v1767 = vld [vmem:[#allocation4 + $0x2c] sm:$0xff]
        %v1768 = vld [vmem:[#allocation4 + $0x34] sm:$0xff]
        %v1769 = vld [vmem:[#allocation4 + $0x3c] sm:$0xff]
        %v1770 = vld [vmem:[#allocation4 + $0x44] sm:$0xff]
        %v1771 = vld [vmem:[#allocation4 + $0x4c] sm:$0xff]
        %v1772 = vld [vmem:[#allocation4 + $0x54] sm:$0xff]
        %v1773 = vld [vmem:[#allocation4 + $0x5c] sm:$0xff]
        %v1774 = vpack.c.bf16 %v1765, %v1764
        %v1775 = vpack.c.bf16 %v1767, %v1766
        %v1776 = vpack.c.bf16 %v1769, %v1768
        %v1777 = vpack.c.bf16 %v1771, %v1770
        %v1778 = vpack.c.bf16 %v1773, %v1772
        %v1784 = vunpack.c.l.b16 %v1774
        %v1785 = vunpack.c.h.b16 %v1774
        %v1786 = vunpack.c.l.b16 %v1775
        %v1787 = vunpack.c.h.b16 %v1775
        %v1788 = vunpack.c.l.b16 %v1776
        %v1789 = vunpack.c.h.b16 %v1776
        %v1790 = vunpack.c.l.b16 %v1777
        %v1791 = vunpack.c.h.b16 %v1777
        %v1792 = vunpack.c.l.b16 %v1778
        %v1793 = vunpack.c.h.b16 %v1778
        %v1794 = vpack.c.b16 %v1784, %v1784
        %v1795 = vpack.c.b16 %v1785, %v1785
        %v1796 = vpack.c.b16 %v1786, %v1786
        %v1797 = vpack.c.b16 %v1787, %v1787
        %v1798 = vpack.c.b16 %v1788, %v1788
        %v1799 = vpack.c.b16 %v1789, %v1789
        %v1800 = vpack.c.b16 %v1790, %v1790
        %v1801 = vpack.c.b16 %v1791, %v1791
        %v1802 = vpack.c.b16 %v1792, %v1792
        %v1803 = vpack.c.b16 %v1793, %v1793
        %1804 = vrot.lane.b32.xlu0 %v1794, 48
        %v1805 = vpop.permute.xlu0 %1804
        %1806 = vrot.lane.b32.xlu0 %v1795, 48
        %v1807 = vpop.permute.xlu0 %1806
        %1808 = vrot.lane.b32.xlu0 %v1796, 48
        %v1809 = vpop.permute.xlu0 %1808
        %1810 = vrot.lane.b32.xlu0 %v1797, 48
        %v1811 = vpop.permute.xlu0 %1810
        %1812 = vrot.lane.b32.xlu0 %v1798, 48
        %v1813 = vpop.permute.xlu0 %1812
        %1814 = vrot.lane.b32.xlu0 %v1799, 48
        %v1815 = vpop.permute.xlu0 %1814
        %1816 = vrot.lane.b32.xlu0 %v1800, 48
        %v1817 = vpop.permute.xlu0 %1816
        %1818 = vrot.lane.b32.xlu0 %v1801, 48
        %v1819 = vpop.permute.xlu0 %1818
        %1820 = vrot.lane.b32.xlu0 %v1802, 48
        %v1821 = vpop.permute.xlu0 %1820
        %1822 = vrot.lane.b32.xlu0 %v1803, 48
        %v1823 = vpop.permute.xlu0 %1822
        %vm1834 = vcmask 454016
        %1835 = vst.msk [vmem:[#allocation5] sm:$0xf] %vm1834, %v1805
        %1836 = vst.msk [vmem:[#allocation5 + $0x4] sm:$0xf] %vm1834, %v1807
        %1837 = vst.msk [vmem:[#allocation5 + $0x8] sm:$0xf] %vm1834, %v1809
        %1838 = vst.msk [vmem:[#allocation5 + $0xc] sm:$0xf] %vm1834, %v1811
        %1839 = vst.msk [vmem:[#allocation5 + $0x10] sm:$0xf] %vm1834, %v1813
        %1840 = vst.msk [vmem:[#allocation5 + $0x14] sm:$0xf] %vm1834, %v1815
        %1841 = vst.msk [vmem:[#allocation5 + $0x18] sm:$0xf] %vm1834, %v1817
        %1842 = vst.msk [vmem:[#allocation5 + $0x1c] sm:$0xf] %vm1834, %v1819
        %1843 = vst.msk [vmem:[#allocation5 + $0x20] sm:$0xf] %vm1834, %v1821
        %1844 = vst.msk [vmem:[#allocation5 + $0x24] sm:$0xf] %vm1834, %v1823
        %v1845 = vld [vmem:[#allocation4 + $0x15] sm:$0xff]
        %v1846 = vld [vmem:[#allocation4 + $0x1d] sm:$0xff]
        %v1847 = vld [vmem:[#allocation4 + $0x25] sm:$0xff]
        %v1848 = vld [vmem:[#allocation4 + $0x2d] sm:$0xff]
        %v1849 = vld [vmem:[#allocation4 + $0x35] sm:$0xff]
        %v1850 = vld [vmem:[#allocation4 + $0x3d] sm:$0xff]
        %v1851 = vld [vmem:[#allocation4 + $0x45] sm:$0xff]
        %v1852 = vld [vmem:[#allocation4 + $0x4d] sm:$0xff]
        %v1853 = vld [vmem:[#allocation4 + $0x55] sm:$0xff]
        %v1854 = vld [vmem:[#allocation4 + $0x5d] sm:$0xff]
        %v1855 = vpack.c.bf16 %v1846, %v1845
        %v1856 = vpack.c.bf16 %v1848, %v1847
        %v1857 = vpack.c.bf16 %v1850, %v1849
        %v1858 = vpack.c.bf16 %v1852, %v1851
        %v1859 = vpack.c.bf16 %v1854, %v1853
        %v1865 = vunpack.c.l.b16 %v1855
        %v1866 = vunpack.c.h.b16 %v1855
        %v1867 = vunpack.c.l.b16 %v1856
        %v1868 = vunpack.c.h.b16 %v1856
        %v1869 = vunpack.c.l.b16 %v1857
        %v1870 = vunpack.c.h.b16 %v1857
        %v1871 = vunpack.c.l.b16 %v1858
        %v1872 = vunpack.c.h.b16 %v1858
        %v1873 = vunpack.c.l.b16 %v1859
        %v1874 = vunpack.c.h.b16 %v1859
        %v1875 = vpack.c.b16 %v1865, %v1865
        %v1876 = vpack.c.b16 %v1866, %v1866
        %v1877 = vpack.c.b16 %v1867, %v1867
        %v1878 = vpack.c.b16 %v1868, %v1868
        %v1879 = vpack.c.b16 %v1869, %v1869
        %v1880 = vpack.c.b16 %v1870, %v1870
        %v1881 = vpack.c.b16 %v1871, %v1871
        %v1882 = vpack.c.b16 %v1872, %v1872
        %v1883 = vpack.c.b16 %v1873, %v1873
        %v1884 = vpack.c.b16 %v1874, %v1874
        %1885 = vrot.lane.b32.xlu0 %v1875, 56
        %v1886 = vpop.permute.xlu0 %1885
        %1887 = vrot.lane.b32.xlu0 %v1876, 56
        %v1888 = vpop.permute.xlu0 %1887
        %1889 = vrot.lane.b32.xlu0 %v1877, 56
        %v1890 = vpop.permute.xlu0 %1889
        %1891 = vrot.lane.b32.xlu0 %v1878, 56
        %v1892 = vpop.permute.xlu0 %1891
        %1893 = vrot.lane.b32.xlu0 %v1879, 56
        %v1894 = vpop.permute.xlu0 %1893
        %1895 = vrot.lane.b32.xlu0 %v1880, 56
        %v1896 = vpop.permute.xlu0 %1895
        %1897 = vrot.lane.b32.xlu0 %v1881, 56
        %v1898 = vpop.permute.xlu0 %1897
        %1899 = vrot.lane.b32.xlu0 %v1882, 56
        %v1900 = vpop.permute.xlu0 %1899
        %1901 = vrot.lane.b32.xlu0 %v1883, 56
        %v1902 = vpop.permute.xlu0 %1901
        %1903 = vrot.lane.b32.xlu0 %v1884, 56
        %v1904 = vpop.permute.xlu0 %1903
        %vm1915 = vcmask 519616
        %1916 = vst.msk [vmem:[#allocation5] sm:$0xf] %vm1915, %v1886
        %1917 = vst.msk [vmem:[#allocation5 + $0x4] sm:$0xf] %vm1915, %v1888
        %1918 = vst.msk [vmem:[#allocation5 + $0x8] sm:$0xf] %vm1915, %v1890
        %1919 = vst.msk [vmem:[#allocation5 + $0xc] sm:$0xf] %vm1915, %v1892
        %1920 = vst.msk [vmem:[#allocation5 + $0x10] sm:$0xf] %vm1915, %v1894
        %1921 = vst.msk [vmem:[#allocation5 + $0x14] sm:$0xf] %vm1915, %v1896
        %1922 = vst.msk [vmem:[#allocation5 + $0x18] sm:$0xf] %vm1915, %v1898
        %1923 = vst.msk [vmem:[#allocation5 + $0x1c] sm:$0xf] %vm1915, %v1900
        %1924 = vst.msk [vmem:[#allocation5 + $0x20] sm:$0xf] %vm1915, %v1902
        %1925 = vst.msk [vmem:[#allocation5 + $0x24] sm:$0xf] %vm1915, %v1904
        %v1926 = vld [vmem:[#allocation4 + $0x16] sm:$0xff]
        %v1927 = vld [vmem:[#allocation4 + $0x1e] sm:$0xff]
        %v1928 = vld [vmem:[#allocation4 + $0x26] sm:$0xff]
        %v1929 = vld [vmem:[#allocation4 + $0x2e] sm:$0xff]
        %v1930 = vld [vmem:[#allocation4 + $0x36] sm:$0xff]
        %v1931 = vld [vmem:[#allocation4 + $0x3e] sm:$0xff]
        %v1932 = vld [vmem:[#allocation4 + $0x46] sm:$0xff]
        %v1933 = vld [vmem:[#allocation4 + $0x4e] sm:$0xff]
        %v1934 = vld [vmem:[#allocation4 + $0x56] sm:$0xff]
        %v1935 = vld [vmem:[#allocation4 + $0x5e] sm:$0xff]
        %v1936 = vpack.c.bf16 %v1927, %v1926
        %v1937 = vpack.c.bf16 %v1929, %v1928
        %v1938 = vpack.c.bf16 %v1931, %v1930
        %v1939 = vpack.c.bf16 %v1933, %v1932
        %v1940 = vpack.c.bf16 %v1935, %v1934
        %v1946 = vunpack.c.l.b16 %v1936
        %v1947 = vunpack.c.h.b16 %v1936
        %v1948 = vunpack.c.l.b16 %v1937
        %v1949 = vunpack.c.h.b16 %v1937
        %v1950 = vunpack.c.l.b16 %v1938
        %v1951 = vunpack.c.h.b16 %v1938
        %v1952 = vunpack.c.l.b16 %v1939
        %v1953 = vunpack.c.h.b16 %v1939
        %v1954 = vunpack.c.l.b16 %v1940
        %v1955 = vunpack.c.h.b16 %v1940
        %v1956 = vpack.c.b16 %v1946, %v1946
        %v1957 = vpack.c.b16 %v1947, %v1947
        %v1958 = vpack.c.b16 %v1948, %v1948
        %v1959 = vpack.c.b16 %v1949, %v1949
        %v1960 = vpack.c.b16 %v1950, %v1950
        %v1961 = vpack.c.b16 %v1951, %v1951
        %v1962 = vpack.c.b16 %v1952, %v1952
        %v1963 = vpack.c.b16 %v1953, %v1953
        %v1964 = vpack.c.b16 %v1954, %v1954
        %v1965 = vpack.c.b16 %v1955, %v1955
        %1966 = vrot.lane.b32.xlu0 %v1956, 64
        %v1967 = vpop.permute.xlu0 %1966
        %1968 = vrot.lane.b32.xlu0 %v1957, 64
        %v1969 = vpop.permute.xlu0 %1968
        %1970 = vrot.lane.b32.xlu0 %v1958, 64
        %v1971 = vpop.permute.xlu0 %1970
        %1972 = vrot.lane.b32.xlu0 %v1959, 64
        %v1973 = vpop.permute.xlu0 %1972
        %1974 = vrot.lane.b32.xlu0 %v1960, 64
        %v1975 = vpop.permute.xlu0 %1974
        %1976 = vrot.lane.b32.xlu0 %v1961, 64
        %v1977 = vpop.permute.xlu0 %1976
        %1978 = vrot.lane.b32.xlu0 %v1962, 64
        %v1979 = vpop.permute.xlu0 %1978
        %1980 = vrot.lane.b32.xlu0 %v1963, 64
        %v1981 = vpop.permute.xlu0 %1980
        %1982 = vrot.lane.b32.xlu0 %v1964, 64
        %v1983 = vpop.permute.xlu0 %1982
        %1984 = vrot.lane.b32.xlu0 %v1965, 64
        %v1985 = vpop.permute.xlu0 %1984
        %vm1996 = vcmask 585216
        %1997 = vst.msk [vmem:[#allocation5] sm:$0xf] %vm1996, %v1967
        %1998 = vst.msk [vmem:[#allocation5 + $0x4] sm:$0xf] %vm1996, %v1969
        %1999 = vst.msk [vmem:[#allocation5 + $0x8] sm:$0xf] %vm1996, %v1971
        %2000 = vst.msk [vmem:[#allocation5 + $0xc] sm:$0xf] %vm1996, %v1973
        %2001 = vst.msk [vmem:[#allocation5 + $0x10] sm:$0xf] %vm1996, %v1975
        %2002 = vst.msk [vmem:[#allocation5 + $0x14] sm:$0xf] %vm1996, %v1977
        %2003 = vst.msk [vmem:[#allocation5 + $0x18] sm:$0xf] %vm1996, %v1979
        %2004 = vst.msk [vmem:[#allocation5 + $0x1c] sm:$0xf] %vm1996, %v1981
        %2005 = vst.msk [vmem:[#allocation5 + $0x20] sm:$0xf] %vm1996, %v1983
        %2006 = vst.msk [vmem:[#allocation5 + $0x24] sm:$0xf] %vm1996, %v1985
        %v2007 = vld [vmem:[#allocation5] sm:$0xf]
        %v2008 = vld [vmem:[#allocation5 + $0x4] sm:$0xf]
        %v2009 = vld [vmem:[#allocation5 + $0x8] sm:$0xf]
        %v2010 = vld [vmem:[#allocation5 + $0xc] sm:$0xf]
        %v2011 = vld [vmem:[#allocation5 + $0x10] sm:$0xf]
        %v2012 = vld [vmem:[#allocation5 + $0x14] sm:$0xf]
        %v2013 = vld [vmem:[#allocation5 + $0x18] sm:$0xf]
        %v2014 = vld [vmem:[#allocation5 + $0x1c] sm:$0xf]
        %v2015 = vld [vmem:[#allocation5 + $0x20] sm:$0xf]
        %v2016 = vld [vmem:[#allocation5 + $0x24] sm:$0xf]
        %v2017 = vld [vmem:[%s2] sm:$0xf]
        %v2018 = vld [vmem:[%s2 + $0x4] sm:$0xf]
        %v2019 = vld [vmem:[%s2 + $0x8] sm:$0xf]
        %v2020 = vld [vmem:[%s2 + $0xc] sm:$0xf]
        %v2021 = vld [vmem:[%s2 + $0x10] sm:$0xf]
        %v2022 = vld [vmem:[%s2 + $0x14] sm:$0xf]
        %v2023 = vld [vmem:[%s2 + $0x18] sm:$0xf]
        %v2024 = vld [vmem:[%s2 + $0x1c] sm:$0xf]
        %v2025 = vld [vmem:[%s2 + $0x20] sm:$0xf]
        %v2036 = vunpack.c.l.b16 %v2007
        %v2037 = vunpack.c.l.b16 %v2008
        %v2038 = vunpack.c.l.b16 %v2009
        %v2039 = vunpack.c.l.b16 %v2010
        %v2040 = vunpack.c.l.b16 %v2011
        %v2041 = vunpack.c.l.b16 %v2012
        %v2042 = vunpack.c.l.b16 %v2013
        %v2043 = vunpack.c.l.b16 %v2014
        %v2044 = vunpack.c.l.b16 %v2015
        %v2045 = vunpack.c.l.b16 %v2016
        %v2046 = vpack.c.b16 %v2037, %v2036
        %v2047 = vpack.c.b16 %v2039, %v2038
        %v2048 = vpack.c.b16 %v2041, %v2040
        %v2049 = vpack.c.b16 %v2043, %v2042
        %v2050 = vpack.c.b16 %v2045, %v2044
        %v2060 = vunpack.c.l.b16 %v2017
        %v2061 = vunpack.c.l.b16 %v2018
        %v2062 = vunpack.c.l.b16 %v2019
        %v2063 = vunpack.c.l.b16 %v2020
        %v2064 = vunpack.c.l.b16 %v2021
        %v2065 = vunpack.c.l.b16 %v2022
        %v2066 = vunpack.c.l.b16 %v2023
        %v2067 = vunpack.c.l.b16 %v2024
        %v2068 = vunpack.c.l.b16 %v2025
        %v2069 = vpack.c.b16 %v2061, %v2060
        %v2070 = vpack.c.b16 %v2063, %v2062
        %v2071 = vpack.c.b16 %v2065, %v2064
        %v2072 = vpack.c.b16 %v2067, %v2066
        %v2073 = vpack.c.b16 %v2068, %v2068
        %vm2078 = vcmask 588800
        %v2080 = vsel %vm2078, %v2046, 0
        %v2083 = vsel %vm2078, %v2047, 0
        %v2086 = vsel %vm2078, %v2048, 0
        %v2089 = vsel %vm2078, %v2049, 0
        %v2092 = vsel %vm2078, %v2050, 0
        %vm2094 = vcmask 1043456
        %v2096 = vsel %vm2094, %v2073, 0
        %2098 = vmatprep.subr.bf16.mxu0 0
        %2099 = vmatpush1.bf16.msra.mxu0 0
        %2100 = vmatprep.subr.bf16.mxu0 0
        %2101 = vmatpush1.bf16.msra.mxu0 0
        %2102 = vmatprep.subr.bf16.mxu0 0
        %2103 = vmatpush1.bf16.msra.mxu0 0
        %2104 = vmatprep.subr.bf16.mxu0 0
        %2105 = vmatpush1.bf16.msra.mxu0 %v2096
        %2106 = vmatprep.subr.bf16.mxu0 0
        %2107 = vmatpush1.bf16.msra.mxu0 %v2072
        %2108 = vmatprep.subr.bf16.mxu0 0
        %2109 = vmatpush1.bf16.msra.mxu0 %v2071
        %2110 = vmatprep.subr.bf16.mxu0 0
        %2111 = vmatpush1.bf16.msra.mxu0 %v2070
        %2112 = vmatprep.subr.bf16.mxu0 0
        %2113 = vmatpush1.bf16.msra.mxu0 %v2069
        %2114 = vmatprep.subr.bf16.mxu0 0
        %2115 = vmatpush2.bf16.msra.mxu0 0
        %2116 = vmatprep.subr.bf16.mxu0 0
        %2117 = vmatpush2.bf16.msra.mxu0 0
        %2118 = vmatprep.subr.bf16.mxu0 0
        %2119 = vmatpush2.bf16.msra.mxu0 0
        %2120 = vmatprep.subr.bf16.mxu0 0
        %2121 = vmatpush2.bf16.msra.mxu0 0
        %2122 = vmatprep.subr.bf16.mxu0 0
        %2123 = vmatpush2.bf16.msra.mxu0 0
        %2124 = vmatprep.subr.bf16.mxu0 0
        %2125 = vmatpush2.bf16.msra.mxu0 0
        %2126 = vmatprep.subr.bf16.mxu0 0
        %2127 = vmatpush2.bf16.msra.mxu0 0
        %2128 = vmatprep.subr.bf16.mxu0 0
        %2129 = vmatpush2.bf16.msra.mxu0 0
        %2130 = vmatprep.mubr.bf16.mxu0 0
        %2131 = vmatmul.mubr.bf16.gmra.mxu0 %v2080
        %v2132 = vpop.f32.mrf.mxu0
        %v2133 = vadd.f32 0.0, %v2132
        %v2134 = vpop.f32.mrf.mxu0
        %v2135 = vpop.f32.mrf.mxu0
        %v2136 = vadd.f32 0.0, %v2135
        %v2137 = vpop.f32.mrf.mxu0
        %2138 = vmatprep.mubr.bf16.mxu0 0
        %2139 = vmatmul.mubr.bf16.gmra.mxu0 %v2083
        %v2140 = vpop.f32.mrf.mxu0
        %v2141 = vadd.f32 0.0, %v2140
        %v2142 = vpop.f32.mrf.mxu0
        %v2143 = vpop.f32.mrf.mxu0
        %v2144 = vadd.f32 0.0, %v2143
        %v2145 = vpop.f32.mrf.mxu0
        %2146 = vmatprep.mubr.bf16.mxu0 0
        %2147 = vmatmul.mubr.bf16.gmra.mxu0 %v2086
        %v2148 = vpop.f32.mrf.mxu0
        %v2149 = vadd.f32 0.0, %v2148
        %v2150 = vpop.f32.mrf.mxu0
        %v2151 = vpop.f32.mrf.mxu0
        %v2152 = vadd.f32 0.0, %v2151
        %v2153 = vpop.f32.mrf.mxu0
        %2154 = vmatprep.mubr.bf16.mxu0 0
        %2155 = vmatmul.mubr.bf16.gmra.mxu0 %v2089
        %v2156 = vpop.f32.mrf.mxu0
        %v2157 = vadd.f32 0.0, %v2156
        %v2158 = vpop.f32.mrf.mxu0
        %v2159 = vpop.f32.mrf.mxu0
        %v2160 = vadd.f32 0.0, %v2159
        %v2161 = vpop.f32.mrf.mxu0
        %2162 = vmatprep.mubr.bf16.mxu0 0
        %2163 = vmatmul.mubr.bf16.gmra.mxu0 %v2092
        %v2164 = vpop.f32.mrf.mxu0
        %v2165 = vadd.f32 0.0, %v2164
        %v2166 = vpop.f32.mrf.mxu0
        %v2167 = vpop.f32.mrf.mxu0
        %v2168 = vadd.f32 0.0, %v2167
        %v2169 = vpop.f32.mrf.mxu0
        %2170 = vdwg.mxu0
        %v2171 = vmax.f32 %v2133, 0.0
        %v2172 = vmax.f32 %v2136, 0.0
        %v2173 = vmax.f32 %v2141, 0.0
        %v2174 = vmax.f32 %v2144, 0.0
        %v2175 = vmax.f32 %v2149, 0.0
        %v2176 = vmax.f32 %v2152, 0.0
        %v2177 = vmax.f32 %v2157, 0.0
        %v2178 = vmax.f32 %v2160, 0.0
        %v2179 = vmax.f32 %v2165, 0.0
        %v2180 = vmax.f32 %v2168, 0.0
        %v2181 = vmul.f32 %v2171, %v1230
        %v2182 = vmul.f32 %v2172, %v1235
        %v2183 = vmul.f32 %v2173, %v1240
        %v2184 = vmul.f32 %v2174, %v1245
        %v2185 = vmul.f32 %v2175, %v1250
        %v2186 = vmul.f32 %v2176, %v1255
        %v2187 = vmul.f32 %v2177, %v1260
        %v2188 = vmul.f32 %v2178, %v1265
        %v2189 = vmul.f32 %v2179, %v1270
        %v2190 = vmul.f32 %v2180, %v1275
        %2191 = vst.msk [vmem:[%s248] sm:$0xff] %vm1287, %v2181
        %2192 = vst.msk [vmem:[%s248 + $0x8] sm:$0xff] %vm1287, %v2182
        %2193 = vst.msk [vmem:[%s248 + $0x10] sm:$0xff] %vm1287, %v2183
        %2194 = vst.msk [vmem:[%s248 + $0x18] sm:$0xff] %vm1287, %v2184
        %2195 = vst.msk [vmem:[%s248 + $0x20] sm:$0xff] %vm1287, %v2185
        %2196 = vst.msk [vmem:[%s248 + $0x28] sm:$0xff] %vm1287, %v2186
        %2197 = vst.msk [vmem:[%s248 + $0x30] sm:$0xff] %vm1287, %v2187
        %2198 = vst.msk [vmem:[%s248 + $0x38] sm:$0xff] %vm1287, %v2188
        %2199 = vst.msk [vmem:[%s248 + $0x40] sm:$0xff] %vm1287, %v2189
        %2200 = vst.msk [vmem:[%s248 + $0x48] sm:$0xff] %vm1287, %v2190
        // Predicated region
        $region41: #{tpu_custom_call.1} parent=35 // pred_check
          %p2201 = pneg %p323
        $region42: #{tpu_custom_call.1} parent=35 // pred_check_branch
          %2203 = sbr.rel (%p2201) target = $region44
        $region43: #{tpu_custom_call.1} parent=35 // pred_region
          %vm2204 = vcmask 57344
          %2205 = vst.msk [vmem:[#allocation6] sm:$0x1] %vm2204, 0.0
          %2206 = vst.msk [vmem:[#allocation8] sm:$0x1] %vm2204, 0.0
        $region44: #{tpu_custom_call.1} parent=35 // pred_fallthru
          _
        %v2207 = vld [vmem:[#allocation6] sm:$0x1]
        %v2208 = vsel %vm1287, %v2181, 0.0
        %v2209 = vsel %vm1287, %v2182, 0.0
        %v2210 = vadd.f32 %v2208, %v2209
        %v2211 = vsel %vm1287, %v2183, 0.0
        %v2212 = vadd.f32 %v2210, %v2211
        %v2213 = vsel %vm1287, %v2184, 0.0
        %v2214 = vadd.f32 %v2212, %v2213
        %v2215 = vsel %vm1287, %v2185, 0.0
        %v2216 = vadd.f32 %v2214, %v2215
        %v2217 = vsel %vm1287, %v2186, 0.0
        %v2218 = vadd.f32 %v2216, %v2217
        %v2219 = vsel %vm1287, %v2187, 0.0
        %v2220 = vadd.f32 %v2218, %v2219
        %v2221 = vsel %vm1287, %v2188, 0.0
        %v2222 = vadd.f32 %v2220, %v2221
        %v2223 = vsel %vm1287, %v2189, 0.0
        %v2224 = vadd.f32 %v2222, %v2223
        %v2225 = vsel %vm1287, %v2190, 0.0
        %v2226 = vadd.f32 %v2224, %v2225
        %v2227 = vrot.slane %v2226, 4
        %v2228 = vadd.f32 %v2226, %v2227
        %v2229 = vrot.slane %v2228, 2
        %v2230 = vadd.f32 %v2228, %v2229
        %v2231 = vrot.slane %v2230, 1
        %v2232 = vadd.f32 %v2230, %v2231
        %v2233 = vadd.f32 %v2207, %v2232
        %vm2234 = vcmask 57344
        %2235 = vst.msk [vmem:[#allocation6] sm:$0x1] %vm2234, %v2233
        %v2236 = vld [vmem:[#allocation8] sm:$0x1]
        %v2237 = vmul.f32 %v2181, %v2181
        %v2238 = vmul.f32 %v2182, %v2182
        %v2239 = vmul.f32 %v2183, %v2183
        %v2240 = vmul.f32 %v2184, %v2184
        %v2241 = vmul.f32 %v2185, %v2185
        %v2242 = vmul.f32 %v2186, %v2186
        %v2243 = vmul.f32 %v2187, %v2187
        %v2244 = vmul.f32 %v2188, %v2188
        %v2245 = vmul.f32 %v2189, %v2189
        %v2246 = vmul.f32 %v2190, %v2190
        %v2247 = vsel %vm1287, %v2237, 0.0
        %v2248 = vsel %vm1287, %v2238, 0.0
        %v2249 = vadd.f32 %v2247, %v2248
        %v2250 = vsel %vm1287, %v2239, 0.0
        %v2251 = vadd.f32 %v2249, %v2250
        %v2252 = vsel %vm1287, %v2240, 0.0
        %v2253 = vadd.f32 %v2251, %v2252
        %v2254 = vsel %vm1287, %v2241, 0.0
        %v2255 = vadd.f32 %v2253, %v2254
        %v2256 = vsel %vm1287, %v2242, 0.0
        %v2257 = vadd.f32 %v2255, %v2256
        %v2258 = vsel %vm1287, %v2243, 0.0
        %v2259 = vadd.f32 %v2257, %v2258
        %v2260 = vsel %vm1287, %v2244, 0.0
        %v2261 = vadd.f32 %v2259, %v2260
        %v2262 = vsel %vm1287, %v2245, 0.0
        %v2263 = vadd.f32 %v2261, %v2262
        %v2264 = vsel %vm1287, %v2246, 0.0
        %v2265 = vadd.f32 %v2263, %v2264
        %v2266 = vrot.slane %v2265, 4
        %v2267 = vadd.f32 %v2265, %v2266
        %v2268 = vrot.slane %v2267, 2
        %v2269 = vadd.f32 %v2267, %v2268
        %v2270 = vrot.slane %v2269, 1
        %v2271 = vadd.f32 %v2269, %v2270
        %v2272 = vadd.f32 %v2236, %v2271
        %2273 = vst.msk [vmem:[#allocation8] sm:$0x1] %vm2234, %v2272
        %p2274 = scmp.lt.s32.totalorder %s20, 1
        %s2275 = scalar_select %p2274, %s20, 1
        %s2276 = smul.addr %s2275, 10
        %s2277 = smul.addr %s2276, 8
        %s2278 = scalar_lea.vmem %s4, %s2277
        // Predicated region
        $region45: #{tpu_custom_call.1} parent=35 // pred_check
          %p2279 = pneg %p127
        $region46: #{tpu_custom_call.1} parent=35 // pred_check_branch
          %2281 = sbr.rel (%p2279) target = $region48
        $region47: #{tpu_custom_call.1} parent=35 // pred_region
          _
        $region48: #{tpu_custom_call.1} parent=35 // pred_fallthru
          _
        // Predicated region
        $region49: #{tpu_custom_call.1} parent=35 // pred_check
          %p2282 = pneg %p148
        $region50: #{tpu_custom_call.1} parent=35 // pred_check_branch
          %2284 = sbr.rel (%p2282) target = $region52
        $region51: #{tpu_custom_call.1} parent=35 // pred_region
          %s2286 = ssub.s32 16, 16
          %2287 = vsyncadd [#allocation7], %s2286
          %s2289 = sshll.u32 [#allocation6], 4
          %s2290 = int_to_ptr.vmem [resolvable:$true] %s2289
          %2292 = dma.vmem_to_hbm [thread:$0]  %s2290, 16, %s5, [#allocation7]
        $region52: #{tpu_custom_call.1} parent=35 // pred_fallthru
          _
        // Predicated region
        $region53: #{tpu_custom_call.1} parent=35 // pred_check
          %p2293 = pneg %p169
        $region54: #{tpu_custom_call.1} parent=35 // pred_check_branch
          %2295 = sbr.rel (%p2293) target = $region56
        $region55: #{tpu_custom_call.1} parent=35 // pred_region
          %s2297 = ssub.s32 16, 16
          %2298 = vsyncadd [#allocation9], %s2297
          %s2300 = sshll.u32 [#allocation8], 4
          %s2301 = int_to_ptr.vmem [resolvable:$true] %s2300
          %2303 = dma.vmem_to_hbm [thread:$0]  %s2301, 16, %s6, [#allocation9]
        $region56: #{tpu_custom_call.1} parent=35 // pred_fallthru
          _
        // Predicated region
        $region57: #{tpu_custom_call.1} parent=35 // pred_check
          %p2304 = pneg %p148
        $region58: #{tpu_custom_call.1} parent=35 // pred_check_branch
          %2306 = sbr.rel (%p2304) target = $region60
        $region59: #{tpu_custom_call.1} parent=35 // pred_region
          %2307 = dma.done [#allocation7], 16
        $region60: #{tpu_custom_call.1} parent=35 // pred_fallthru
          _
        // Predicated region
        $region61: #{tpu_custom_call.1} parent=35 // pred_check
          %p2308 = pneg %p169
        $region62: #{tpu_custom_call.1} parent=35 // pred_check_branch
          %2310 = sbr.rel (%p2308) target = $region64
        $region63: #{tpu_custom_call.1} parent=35 // pred_region
          %2311 = dma.done [#allocation9], 16
        $region64: #{tpu_custom_call.1} parent=35 // pred_fallthru
          _
      $region36: #{tpu_custom_call.1} parent=5 // pred_fallthru
        _
      %p2312 = scmp.le.s32.totalorder 2, %s15
      // Predicated region
      $region65: #{tpu_custom_call.1} parent=5 // pred_check
        %p2313 = pneg %p2312
      $region66: #{tpu_custom_call.1} parent=5 // pred_check_branch
        %2315 = sbr.rel (%p2313) target = $region68
      $region67: #{tpu_custom_call.1} parent=5 // pred_region
        %s2316 = ssub.s32 %s15, 2
        // Predicated region
        $region69: #{tpu_custom_call.1} parent=67 // pred_check
          %p2317 = pneg %p133
        $region70: #{tpu_custom_call.1} parent=67 // pred_check_branch
          %2319 = sbr.rel (%p2317) target = $region72
        $region71: #{tpu_custom_call.1} parent=67 // pred_region
          %p2320 = scmp.lt.s32.totalorder %s21, 1
          %s2321 = scalar_select %p2320, %s21, 1
          %s2322 = smul.addr %s2321, 10
          %s2323 = smul.addr %s2322, 8
          %s2324 = scalar_lea.vmem %s4, %s2323
        $region72: #{tpu_custom_call.1} parent=67 // pred_fallthru
          _
      $region68: #{tpu_custom_call.1} parent=5 // pred_fallthru
        _
    $region6: #{tpu_custom_call.1} parent=1 // loop_footer
      %s19 = sadd.s32 1, %s15
    $region7: #{tpu_custom_call.1} parent=1 // loop_footer_branch
      %14 = sbr.rel target = $region3
    $region8: #{tpu_custom_call.1} parent=1 // loop_exit
      _
    %2325 = vsyncpa [#allocation7], 1
    %s2326 = scalar_lea.sflag [#allocation7], 1
    %2327 = vsyncpa %s2326, 1
    %2328 = vsyncpa [#allocation9], 1

</llo_original>
